<compile_context>
chip_gen: v7x
topology: tpu7x:2x2x1
jax: 0.10.0
libtpu: 0.0.40
codegen_flags: <defaults>
</compile_context>

<pallas_src>
import functools

import jax
import jax.numpy as jnp
from jax.experimental import pallas as pl
from jax.experimental.pallas import tpu as pltpu


_LANE = 128
_TM_CAP = 1024        # dst-row tile cap (x_src is re-streamed F_src_p/tm of adj bytes)
_TK_CAP = 2048        # src (reduction) tile cap (fewer k steps -> less acc RMW/step ovh)
_TE_CAP = 1024        # decoder edge-tile cap
_VMEM_BUDGET = 48 * 1024 * 1024            # <= v7x 64 MiB physical VMEM
_VMEM_TILE_BUDGET = (3 * _VMEM_BUDGET) // 4  # headroom for double buffering slack


def _round_up(x, m):
    return (x + m - 1) // m * m


@functools.lru_cache(maxsize=1)
def _min_dst_tiles():
    # v7x has 2 TensorCores per chip: keep >=2 dst tiles on the "parallel" axis
    # so both cores get work.  v5e / v6e have 1 TC -> just maximize the tile.
    try:
        kind = jax.devices()[0].device_kind.lower()
    except Exception:
        return 1
    return 2 if "v7" in kind else 1


def _pick_tile(n, cap, min_tiles=1):
    """Largest lane-aligned tile <= cap that minimizes round-up waste on n
    (avoids up to ~2x padded rows/cols), optionally keeping >= min_tiles tiles."""
    n_p = _round_up(max(n, 1), _LANE)
    enforce = (n_p // _LANE) >= min_tiles
    best_t, best_pad = _LANE, n_p
    for t in range(_LANE, min(cap, n_p) + 1, _LANE):
        padded = _round_up(n_p, t)
        if enforce and padded // t < min_tiles:
            continue
        if padded < best_pad or (padded == best_pad and t > best_t):
            best_t, best_pad = t, padded
    return best_t


def _conv_tiles(n_dst, n_src, in_src_p, in_dst_p, out_p):
    """Adaptive (tm, tk) that minimize padding waste and fit the VMEM budget."""
    tm = _pick_tile(n_dst, _TM_CAP, min_tiles=_min_dst_tiles())
    tk = _pick_tile(n_src, _TK_CAP)

    def footprint(tm_, tk_):
        bf, f32 = 2, 4
        return (2 * tm_ * tk_ * bf                       # adj (double buffered)
                + 2 * tk_ * in_src_p * bf                # x_src
                + 2 * tm_ * in_dst_p * bf                # x_dst
                + 2 * (in_src_p + in_dst_p) * out_p * bf  # w_rel + w_root
                + 2 * out_p * f32                        # bias
                + 2 * tm_ * out_p * bf                   # out
                + tm_ * in_src_p * f32)                  # f32 accumulator scratch

    while footprint(tm, tk) > _VMEM_TILE_BUDGET and tk > _LANE:
        tk = max(_LANE, (tk // 2) // _LANE * _LANE)
    while footprint(tm, tk) > _VMEM_TILE_BUDGET and tm > _LANE:
        tm = max(_LANE, (tm // 2) // _LANE * _LANE)
    return tm, tk


# ---------------------------------------------------------------------------
# Pallas kernels
# ---------------------------------------------------------------------------
def _graphconv_kernel(adj_ref, xs_ref, xd_ref, wrel_ref, wroot_ref, b_ref,
                      o_ref, acc_ref, *, apply_relu):
    """GraphConv (PyG): out_i = lin_rel( sum_j w_ji * x_j ) + b + lin_root(x_i).

    Grid = (dst_tiles, src_tiles).  The src axis is a reduction: the A @ X_src
    aggregation is accumulated in f32 scratch; on the last src tile the rel and
    root projections run as two MXU matmuls (no in-kernel concat) and store.
    """
    k = pl.program_id(1)

    @pl.when(k == 0)
    def _():
        acc_ref[...] = jnp.zeros_like(acc_ref)

    # [tm, tk] @ [tk, in_src_p] -> f32 accumulate
    acc_ref[...] += jnp.dot(adj_ref[...], xs_ref[...],
                            preferred_element_type=jnp.float32)

    @pl.when(k == pl.num_programs(1) - 1)
    def _():
        # TODO(synk): aggregation accumulator is down-cast to bf16 before the
        # rel projection; compare against a f32 reference with a tolerance.
        out = jnp.dot(acc_ref[...].astype(wrel_ref.dtype), wrel_ref[...],
                      preferred_element_type=jnp.float32)
        out += jnp.dot(xd_ref[...], wroot_ref[...],
                       preferred_element_type=jnp.float32)
        out += b_ref[...]
        if apply_relu:
            out = jnp.maximum(out, 0.0)
        o_ref[...] = out.astype(o_ref.dtype)


def _dot_decoder_kernel(zu_ref, zg_ref, o_ref):
    # DotProductEdgeDecoder: inputs are [hidden_p, te] (edges on lanes),
    # reduce over the feature (sublane) axis -> lane-dense (1, te) output.
    prod = zu_ref[...].astype(jnp.float32) * zg_ref[...].astype(jnp.float32)
    o_ref[...] = jnp.sum(prod, axis=0, keepdims=True)


# ---------------------------------------------------------------------------
# Pallas wrappers
# ---------------------------------------------------------------------------
def prepare_adjacency(adj, max_in_src_p, max_in_dst_p, max_out_p):
    """Pad + bf16-cast the adjacency ONCE per edge type (it is reused by all
    three conv layers), and fix the tile grid so the layers share the padding.

    TODO(synk): for large sparse graphs replace this dense [n_dst, n_src]
    stream with a scalar-prefetched CSR gather + segment-sum kernel (bytes
    ~ O(|E|*F) instead of O(N^2)); alternatively quantize the dense adjacency
    to int8+scale (v5e/v6e) or fp8 e4m3 (v7x) to halve the dominant HBM stream.
    """
    n_dst, n_src = adj.shape
    tm, tk = _conv_tiles(n_dst, n_src, max_in_src_p, max_in_dst_p, max_out_p)
    n_dst_p = _round_up(n_dst, tm)
    n_src_p = _round_up(n_src, tk)
    adj_p = jnp.pad(adj, ((0, n_dst_p - n_dst),
                          (0, n_src_p - n_src))).astype(jnp.bfloat16)
    return adj_p, tm, tk


def graph_conv(adj_p, tm, tk, x_src, x_dst, w_rel, w_root, bias, *, apply_relu):
    """One hetero GraphConv for a single edge type.

    adj_p:  [n_dst_p, n_src_p] bf16 (pre-padded, pre-cast, reused across layers)
    x_src:  [n_src, in_src_p] bf16,  x_dst: [n_dst, in_dst_p] bf16
    w_rel:  [in_src_p, out_p] bf16,  w_root: [in_dst_p, out_p] bf16
    bias:   [1, out_p] f32
    returns [n_dst, out_p] bf16
    """
    n_dst_p, n_src_p = adj_p.shape
    n_dst, in_dst_p = x_dst.shape
    n_src, in_src_p = x_src.shape
    out_p = w_rel.shape[1]

    xs_p = jnp.pad(x_src, ((0, n_src_p - n_src), (0, 0)))
    xd_p = jnp.pad(x_dst, ((0, n_dst_p - n_dst), (0, 0)))

    grid = (n_dst_p // tm, n_src_p // tk)
    kernel = functools.partial(_graphconv_kernel, apply_relu=apply_relu)

    out = pl.pallas_call(
        kernel,
        out_shape=jax.ShapeDtypeStruct((n_dst_p, out_p), jnp.bfloat16),
        grid_spec=pltpu.PrefetchScalarGridSpec(
            num_scalar_prefetch=0,
            grid=grid,
            in_specs=[
                pl.BlockSpec((tm, tk), lambda i, k: (i, k)),              # adj
                pl.BlockSpec((tk, in_src_p), lambda i, k: (k, 0)),        # x_src
                pl.BlockSpec((tm, in_dst_p), lambda i, k: (i, 0)),        # x_dst
                pl.BlockSpec((in_src_p, out_p), lambda i, k: (0, 0)),     # w_rel
                pl.BlockSpec((in_dst_p, out_p), lambda i, k: (0, 0)),     # w_root
                pl.BlockSpec((1, out_p), lambda i, k: (0, 0)),            # bias
            ],
            out_specs=pl.BlockSpec((tm, out_p), lambda i, k: (i, 0)),
            scratch_shapes=[pltpu.VMEM((tm, in_src_p), jnp.float32)],
        ),
        compiler_params=pltpu.CompilerParams(
            dimension_semantics=("parallel", "arbitrary"),
            vmem_limit_bytes=_VMEM_BUDGET),
    )(adj_p, xs_p, xd_p, w_rel, w_root, bias)
    return out[:n_dst]


def dot_decoder(zu_t, zg_t, te):
    """zu_t, zg_t: [hidden_p, E_p] bf16 -> [E_p] f32 (lane-dense (1, E_p) store)."""
    hidden_p, e_p = zu_t.shape
    out = pl.pallas_call(
        _dot_decoder_kernel,
        out_shape=jax.ShapeDtypeStruct((1, e_p), jnp.float32),
        grid_spec=pltpu.PrefetchScalarGridSpec(
            num_scalar_prefetch=0,
            grid=(e_p // te,),
            in_specs=[pl.BlockSpec((hidden_p, te), lambda j: (0, j)),
                      pl.BlockSpec((hidden_p, te), lambda j: (0, j))],
            out_specs=pl.BlockSpec((1, te), lambda j: (0, j)),
        ),
        compiler_params=pltpu.CompilerParams(
            dimension_semantics=("parallel",),
            vmem_limit_bytes=_VMEM_BUDGET),
    )(zu_t, zg_t)
    return out[0]


# ---------------------------------------------------------------------------
# Model wrapper (glue in plain JAX)
# ---------------------------------------------------------------------------
def dense_adjacency(edge_index, edge_weight, n_src, n_dst):
    # A[dst, src] = edge_weight (duplicate edges add, matching scatter-add aggr).
    src, dst = edge_index[0], edge_index[1]
    adj = jnp.zeros((n_dst, n_src), jnp.float32)
    return adj.at[dst, src].add(edge_weight)


def _pad_lanes(x, lane=_LANE):
    c = x.shape[1]
    return jnp.pad(x, ((0, 0), (0, _round_up(c, lane) - c)))


def init_params(key, user_feat, game_feat_total, hidden):
    """3 hetero layers; each has a conv per edge type.
       Each conv stores (W_rel, W_root, b): weights zero-padded to lane-aligned
       shapes and cast to bf16; bias zero-padded, kept f32."""
    uf_p = _round_up(user_feat, _LANE)
    gf_p = _round_up(game_feat_total, _LANE)
    h_p = _round_up(hidden, _LANE)
    dims = [
        # layer 1: (in_src, in_src_p, in_dst, in_dst_p, out, out_p)
        {"u2g": (user_feat, uf_p, game_feat_total, gf_p, hidden, h_p),
         "g2u": (game_feat_total, gf_p, user_feat, uf_p, hidden, h_p)},
        # layers 2 and 3 (out_channels == hidden_channels in GNNEncoder(h, h))
        {"u2g": (hidden, h_p, hidden, h_p, hidden, h_p),
         "g2u": (hidden, h_p, hidden, h_p, hidden, h_p)},
        {"u2g": (hidden, h_p, hidden, h_p, hidden, h_p),
         "g2u": (hidden, h_p, hidden, h_p, hidden, h_p)},
    ]
    params = []
    for layer_dims in dims:
        layer_p = {}
        for name, (isrc, isrc_p, idst, idst_p, oc, oc_p) in layer_dims.items():
            key, k1, k2, k3 = jax.random.split(key, 4)
            w_rel = jax.random.normal(k1, (isrc, oc), jnp.float32) * 0.1
            b_rel = jax.random.normal(k2, (oc,), jnp.float32) * 0.01
            w_root = jax.random.normal(k3, (idst, oc), jnp.float32) * 0.1
            w_rel_p = (jnp.zeros((isrc_p, oc_p), jnp.float32)
                       .at[:isrc, :oc].set(w_rel).astype(jnp.bfloat16))
            w_root_p = (jnp.zeros((idst_p, oc_p), jnp.float32)
                        .at[:idst, :oc].set(w_root).astype(jnp.bfloat16))
            b_p = jnp.zeros((1, oc_p), jnp.float32).at[0, :oc].set(b_rel)
            layer_p[name] = (w_rel_p, w_root_p, b_p)
        params.append(layer_p)
    return params


def hetero_graphsage_forward(x_user, x_game_raw, game_embedding,
                             adj_u2g, adj_g2u, params, edge_score_index):
    # x_dict['game'] = cat(x_dict['game'], embedding_game.weight, axis=1)
    x_game = jnp.concatenate([x_game_raw, game_embedding], axis=1)

    # lane-pad feature dims to 128 and keep node features in bf16 between layers
    xu = _pad_lanes(x_user).astype(jnp.bfloat16)
    xg = _pad_lanes(x_game).astype(jnp.bfloat16)

    uf_p, gf_p = xu.shape[1], xg.shape[1]
    h_p = params[0]["u2g"][0].shape[1]          # padded out width
    max_f = max(uf_p, gf_p, h_p)

    # adjacency pad + bf16 cast hoisted out of the per-layer conv calls:
    # done ONCE per edge type, reused by all 3 layers.
    adj_u2g_p, tm_g, tk_g = prepare_adjacency(adj_u2g, max_f, max_f, h_p)  # dst=game
    adj_g2u_p, tm_u, tk_u = prepare_adjacency(adj_g2u, max_f, max_f, h_p)  # dst=user

    for layer_idx in range(3):
        p = params[layer_idx]
        apply_relu = layer_idx < 2  # conv1/conv2 -> relu, conv3 -> no relu
        new_xg = graph_conv(adj_u2g_p, tm_g, tk_g, xu, xg, *p["u2g"],
                            apply_relu=apply_relu)
        new_xu = graph_conv(adj_g2u_p, tm_u, tk_u, xg, xu, *p["g2u"],
                            apply_relu=apply_relu)
        xu, xg = new_xu, new_xg

    # TODO(synk): nn.Dropout(0.2) is identity in eval mode; training-time RNG
    # dropout not implemented.

    row, col = edge_score_index[0], edge_score_index[1]
    e = row.shape[0]
    te = _pick_tile(e, _TE_CAP)
    e_p = _round_up(_round_up(max(e, 1), _LANE), te)
    row_p = jnp.pad(row, (0, e_p - e))
    col_p = jnp.pad(col, (0, e_p - e))

    # TODO(synk): fuse this gather into the decoder kernel (scalar-prefetched
    # row/col indices) to avoid materializing two [hidden_p, E_p] arrays for
    # large E; kept in XLA glue here.
    zu_t = jnp.take(xu, row_p, axis=0).T   # [hidden_p, E_p], edges on lanes
    zg_t = jnp.take(xg, col_p, axis=0).T
    scores = dot_decoder(zu_t, zg_t, te)
    return scores[:e]


# ---------------------------------------------------------------------------
# Example run
# ---------------------------------------------------------------------------
if __name__ == "__main__":
    key = jax.random.PRNGKey(0)

    num_users, user_feat = 16, 8
    num_games, game_feat, game_emb_size = 12, 6, 10
    hidden_channels = 32
    num_edges = 24
    num_score_edges = 8

    ks = jax.random.split(key, 10)
    x_user = jax.random.normal(ks[0], (num_users, user_feat), jnp.float32)
    x_game = jax.random.normal(ks[1], (num_games, game_feat), jnp.float32)
    game_embedding = jax.random.normal(ks[2], (num_games, game_emb_size), jnp.float32)

    # ('user','plays','game') edges and their reverse ('game','rev_plays','user')
    e_user = jax.random.randint(ks[3], (num_edges,), 0, num_users)
    e_game = jax.random.randint(ks[4], (num_edges,), 0, num_games)
    w_u2g = jax.random.uniform(ks[5], (num_edges,), jnp.float32)
    w_g2u = jax.random.uniform(ks[6], (num_edges,), jnp.float32)

    edge_index_u2g = jnp.stack([e_user, e_game])   # src=user, dst=game
    edge_index_g2u = jnp.stack([e_game, e_user])   # src=game, dst=user

    adj_u2g = dense_adjacency(edge_index_u2g, w_u2g, num_users, num_games)
    adj_g2u = dense_adjacency(edge_index_g2u, w_g2u, num_games, num_users)

    # edge_score_index: (user row, game col) pairs for the dot-product decoder
    score_row = jax.random.randint(ks[7], (num_score_edges,), 0, num_users)
    score_col = jax.random.randint(ks[8], (num_score_edges,), 0, num_games)
    edge_score_index = jnp.stack([score_row, score_col])

    params = init_params(ks[9], user_feat, game_feat + game_emb_size, hidden_channels)

    fwd = jax.jit(hetero_graphsage_forward)
    out = fwd(x_user, x_game, game_embedding, adj_u2g, adj_g2u, params,
              edge_score_index)
    jax.block_until_ready(out)
    assert out.shape == (num_score_edges,)
    print("KERNEL_OK")
</pallas_src>

<mosaic_0001>
module attributes {stable_mosaic.version = 11 : i64} {
  func.func @_graphconv_kernel(%arg0: i32, %arg1: i32, %arg2: memref<128x128xbf16, #tpu.memory_space<vmem>>, %arg3: memref<128x128xbf16, #tpu.memory_space<vmem>>, %arg4: memref<128x128xbf16, #tpu.memory_space<vmem>>, %arg5: memref<128x128xbf16, #tpu.memory_space<vmem>>, %arg6: memref<128x128xbf16, #tpu.memory_space<vmem>>, %arg7: memref<1x128xf32, #tpu.memory_space<vmem>>, %arg8: memref<128x128xbf16, #tpu.memory_space<vmem>>, %arg9: memref<128x128xf32, #tpu.memory_space<vmem>>) attributes {dimension_semantics = [#tpu.dimension_semantics<parallel>, #tpu.dimension_semantics<arbitrary>], iteration_bounds = array<i64: 1, 1>, scalar_prefetch = 0 : i64, scratch_operands = 1 : i64, tpu.core_type = #tpu.core_type<tc>, window_params = [{transform_indices = @transform_0, window_bounds = array<i64: 128, 128>}, {transform_indices = @transform_1, window_bounds = array<i64: 128, 128>}, {transform_indices = @transform_2, window_bounds = array<i64: 128, 128>}, {pipeline_mode = #tpu.pipeline_mode<synchronous>, transform_indices = @transform_3, window_bounds = array<i64: 128, 128>}, {pipeline_mode = #tpu.pipeline_mode<synchronous>, transform_indices = @transform_4, window_bounds = array<i64: 128, 128>}, {pipeline_mode = #tpu.pipeline_mode<synchronous>, transform_indices = @transform_5, window_bounds = array<i64: 1, 128>}, {transform_indices = @transform_6, window_bounds = array<i64: 128, 128>}]} {
    %c0_i32 = arith.constant 0 : i32
    %0 = arith.cmpi eq, %arg1, %c0_i32 : i32
    %1 = arith.extui %0 : i1 to i32
    %c0_i32_0 = arith.constant 0 : i32
    %2 = arith.cmpi ne, %1, %c0_i32_0 : i32
    scf.if %2 {
      %cst_10 = arith.constant 0.000000e+00 : f32
      %12 = vector.broadcast %cst_10 : f32 to vector<128x128xf32>
      %c0_11 = arith.constant 0 : index
      %c0_12 = arith.constant 0 : index
      %13 = vector.load %arg9[%c0_11, %c0_12] : memref<128x128xf32, #tpu.memory_space<vmem>>, vector<128x128xf32>
      tpu.vector_store %arg9[%c0_11, %c0_12], %12 {strides = array<i32>} : memref<128x128xf32, #tpu.memory_space<vmem>>, vector<128x128xf32>,
    } else {
    }
    %c0 = arith.constant 0 : index
    %c0_1 = arith.constant 0 : index
    %3 = vector.load %arg9[%c0, %c0_1] : memref<128x128xf32, #tpu.memory_space<vmem>>, vector<128x128xf32>
    %c0_2 = arith.constant 0 : index
    %c0_3 = arith.constant 0 : index
    %4 = vector.load %arg2[%c0_2, %c0_3] : memref<128x128xbf16, #tpu.memory_space<vmem>>, vector<128x128xbf16>
    %c0_4 = arith.constant 0 : index
    %c0_5 = arith.constant 0 : index
    %5 = vector.load %arg3[%c0_4, %c0_5] : memref<128x128xbf16, #tpu.memory_space<vmem>>, vector<128x128xbf16>
    %cst = arith.constant dense<0.000000e+00> : vector<128x128xf32>
    %6 = tpu.matmul %4, %5, %cst {dimension_numbers = #tpu.dot_dimension_numbers<[1], [0], [0], [1], [0, 0, 1, 1], [], []>} : vector<128x128xbf16>, vector<128x128xbf16>, vector<128x128xf32> -> vector<128x128xf32>
    %7 = arith.addf %3, %6 : vector<128x128xf32>
    %c0_6 = arith.constant 0 : index
    %c0_7 = arith.constant 0 : index
    %8 = vector.load %arg9[%c0_6, %c0_7] : memref<128x128xf32, #tpu.memory_space<vmem>>, vector<128x128xf32>
    tpu.vector_store %arg9[%c0_6, %c0_7], %7 {strides = array<i32>} : memref<128x128xf32, #tpu.memory_space<vmem>>, vector<128x128xf32>,
    %c0_i32_8 = arith.constant 0 : i32
    %9 = arith.cmpi eq, %arg1, %c0_i32_8 : i32
    %10 = arith.extui %9 : i1 to i32
    %c0_i32_9 = arith.constant 0 : i32
    %11 = arith.cmpi ne, %10, %c0_i32_9 : i32
    scf.if %11 {
      %c0_10 = arith.constant 0 : index
      %c0_11 = arith.constant 0 : index
      %12 = vector.load %arg9[%c0_10, %c0_11] : memref<128x128xf32, #tpu.memory_space<vmem>>, vector<128x128xf32>
      %13 = arith.truncf %12 : vector<128x128xf32> to vector<128x128xbf16>
      %c0_12 = arith.constant 0 : index
      %c0_13 = arith.constant 0 : index
      %14 = vector.load %arg5[%c0_12, %c0_13] : memref<128x128xbf16, #tpu.memory_space<vmem>>, vector<128x128xbf16>
      %cst_14 = arith.constant dense<0.000000e+00> : vector<128x128xf32>
      %15 = tpu.matmul %13, %14, %cst_14 {dimension_numbers = #tpu.dot_dimension_numbers<[1], [0], [0], [1], [0, 0, 1, 1], [], []>} : vector<128x128xbf16>, vector<128x128xbf16>, vector<128x128xf32> -> vector<128x128xf32>
      %c0_15 = arith.constant 0 : index
      %c0_16 = arith.constant 0 : index
      %16 = vector.load %arg4[%c0_15, %c0_16] : memref<128x128xbf16, #tpu.memory_space<vmem>>, vector<128x128xbf16>
      %c0_17 = arith.constant 0 : index
      %c0_18 = arith.constant 0 : index
      %17 = vector.load %arg6[%c0_17, %c0_18] : memref<128x128xbf16, #tpu.memory_space<vmem>>, vector<128x128xbf16>
      %cst_19 = arith.constant dense<0.000000e+00> : vector<128x128xf32>
      %18 = tpu.matmul %16, %17, %cst_19 {dimension_numbers = #tpu.dot_dimension_numbers<[1], [0], [0], [1], [0, 0, 1, 1], [], []>} : vector<128x128xbf16>, vector<128x128xbf16>, vector<128x128xf32> -> vector<128x128xf32>
      %19 = arith.addf %15, %18 : vector<128x128xf32>
      %c0_20 = arith.constant 0 : index
      %c0_21 = arith.constant 0 : index
      %20 = vector.load %arg7[%c0_20, %c0_21] : memref<1x128xf32, #tpu.memory_space<vmem>>, vector<1x128xf32>
      %21 = vector.broadcast %20 : vector<1x128xf32> to vector<128x128xf32>
      %22 = arith.addf %19, %21 : vector<128x128xf32>
      %cst_22 = arith.constant 0.000000e+00 : f32
      %23 = vector.broadcast %cst_22 : f32 to vector<128x128xf32>
      %24 = arith.maximumf %22, %23 : vector<128x128xf32>
      %25 = arith.truncf %24 : vector<128x128xf32> to vector<128x128xbf16>
      %c0_23 = arith.constant 0 : index
      %c0_24 = arith.constant 0 : index
      %26 = vector.load %arg8[%c0_23, %c0_24] : memref<128x128xbf16, #tpu.memory_space<vmem>>, vector<128x128xbf16>
      tpu.vector_store %arg8[%c0_23, %c0_24], %25 {strides = array<i32>} : memref<128x128xbf16, #tpu.memory_space<vmem>>, vector<128x128xbf16>,
    } else {
    }
    return
  }
  func.func @transform_0(%arg0: i32, %arg1: i32) -> (i32, i32) {
    %c0_i32 = arith.constant 0 : i32
    return %arg0, %arg1 : i32, i32
  }
  func.func @transform_1(%arg0: i32, %arg1: i32) -> (i32, i32) {
    %c0_i32 = arith.constant 0 : i32
    %c0_i32_0 = arith.constant 0 : i32
    return %arg1, %c0_i32 : i32, i32
  }
  func.func @transform_2(%arg0: i32, %arg1: i32) -> (i32, i32) {
    %c0_i32 = arith.constant 0 : i32
    %c0_i32_0 = arith.constant 0 : i32
    return %arg0, %c0_i32 : i32, i32
  }
  func.func @transform_3(%arg0: i32, %arg1: i32) -> (i32, i32) {
    %c0_i32 = arith.constant 0 : i32
    %c0_i32_0 = arith.constant 0 : i32
    %c0_i32_1 = arith.constant 0 : i32
    return %c0_i32, %c0_i32_0 : i32, i32
  }
  func.func @transform_4(%arg0: i32, %arg1: i32) -> (i32, i32) {
    %c0_i32 = arith.constant 0 : i32
    %c0_i32_0 = arith.constant 0 : i32
    %c0_i32_1 = arith.constant 0 : i32
    return %c0_i32, %c0_i32_0 : i32, i32
  }
  func.func @transform_5(%arg0: i32, %arg1: i32) -> (i32, i32) {
    %c0_i32 = arith.constant 0 : i32
    %c0_i32_0 = arith.constant 0 : i32
    %c0_i32_1 = arith.constant 0 : i32
    return %c0_i32, %c0_i32_0 : i32, i32
  }
  func.func @transform_6(%arg0: i32, %arg1: i32) -> (i32, i32) {
    %c0_i32 = arith.constant 0 : i32
    %c0_i32_0 = arith.constant 0 : i32
    return %arg0, %c0_i32 : i32, i32
  }
}

module attributes {stable_mosaic.version = 11 : i64} {
  func.func @_graphconv_kernel(%arg0: i32, %arg1: i32, %arg2: memref<128x128xbf16, #tpu.memory_space<vmem>>, %arg3: memref<128x128xbf16, #tpu.memory_space<vmem>>, %arg4: memref<128x128xbf16, #tpu.memory_space<vmem>>, %arg5: memref<128x128xbf16, #tpu.memory_space<vmem>>, %arg6: memref<128x128xbf16, #tpu.memory_space<vmem>>, %arg7: memref<1x128xf32, #tpu.memory_space<vmem>>, %arg8: memref<128x128xbf16, #tpu.memory_space<vmem>>, %arg9: memref<128x128xf32, #tpu.memory_space<vmem>>) attributes {dimension_semantics = [#tpu.dimension_semantics<parallel>, #tpu.dimension_semantics<arbitrary>], iteration_bounds = array<i64: 1, 1>, scalar_prefetch = 0 : i64, scratch_operands = 1 : i64, tpu.core_type = #tpu.core_type<tc>, window_params = [{transform_indices = @transform_0, window_bounds = array<i64: 128, 128>}, {transform_indices = @transform_1, window_bounds = array<i64: 128, 128>}, {transform_indices = @transform_2, window_bounds = array<i64: 128, 128>}, {pipeline_mode = #tpu.pipeline_mode<synchronous>, transform_indices = @transform_3, window_bounds = array<i64: 128, 128>}, {pipeline_mode = #tpu.pipeline_mode<synchronous>, transform_indices = @transform_4, window_bounds = array<i64: 128, 128>}, {pipeline_mode = #tpu.pipeline_mode<synchronous>, transform_indices = @transform_5, window_bounds = array<i64: 1, 128>}, {transform_indices = @transform_6, window_bounds = array<i64: 128, 128>}]} {
    %c0_i32 = arith.constant 0 : i32
    %0 = arith.cmpi eq, %arg1, %c0_i32 : i32
    %1 = arith.extui %0 : i1 to i32
    %c0_i32_0 = arith.constant 0 : i32
    %2 = arith.cmpi ne, %1, %c0_i32_0 : i32
    scf.if %2 {
      %cst_10 = arith.constant 0.000000e+00 : f32
      %12 = vector.broadcast %cst_10 : f32 to vector<128x128xf32>
      %c0_11 = arith.constant 0 : index
      %c0_12 = arith.constant 0 : index
      %13 = vector.load %arg9[%c0_11, %c0_12] : memref<128x128xf32, #tpu.memory_space<vmem>>, vector<128x128xf32>
      tpu.vector_store %arg9[%c0_11, %c0_12], %12 {strides = array<i32>} : memref<128x128xf32, #tpu.memory_space<vmem>>, vector<128x128xf32>,
    } else {
    }
    %c0 = arith.constant 0 : index
    %c0_1 = arith.constant 0 : index
    %3 = vector.load %arg9[%c0, %c0_1] : memref<128x128xf32, #tpu.memory_space<vmem>>, vector<128x128xf32>
    %c0_2 = arith.constant 0 : index
    %c0_3 = arith.constant 0 : index
    %4 = vector.load %arg2[%c0_2, %c0_3] : memref<128x128xbf16, #tpu.memory_space<vmem>>, vector<128x128xbf16>
    %c0_4 = arith.constant 0 : index
    %c0_5 = arith.constant 0 : index
    %5 = vector.load %arg3[%c0_4, %c0_5] : memref<128x128xbf16, #tpu.memory_space<vmem>>, vector<128x128xbf16>
    %cst = arith.constant dense<0.000000e+00> : vector<128x128xf32>
    %6 = tpu.matmul %4, %5, %cst {dimension_numbers = #tpu.dot_dimension_numbers<[1], [0], [0], [1], [0, 0, 1, 1], [], []>} : vector<128x128xbf16>, vector<128x128xbf16>, vector<128x128xf32> -> vector<128x128xf32>
    %7 = arith.addf %3, %6 : vector<128x128xf32>
    %c0_6 = arith.constant 0 : index
    %c0_7 = arith.constant 0 : index
    %8 = vector.load %arg9[%c0_6, %c0_7] : memref<128x128xf32, #tpu.memory_space<vmem>>, vector<128x128xf32>
    tpu.vector_store %arg9[%c0_6, %c0_7], %7 {strides = array<i32>} : memref<128x128xf32, #tpu.memory_space<vmem>>, vector<128x128xf32>,
    %c0_i32_8 = arith.constant 0 : i32
    %9 = arith.cmpi eq, %arg1, %c0_i32_8 : i32
    %10 = arith.extui %9 : i1 to i32
    %c0_i32_9 = arith.constant 0 : i32
    %11 = arith.cmpi ne, %10, %c0_i32_9 : i32
    scf.if %11 {
      %c0_10 = arith.constant 0 : index
      %c0_11 = arith.constant 0 : index
      %12 = vector.load %arg9[%c0_10, %c0_11] : memref<128x128xf32, #tpu.memory_space<vmem>>, vector<128x128xf32>
      %13 = arith.truncf %12 : vector<128x128xf32> to vector<128x128xbf16>
      %c0_12 = arith.constant 0 : index
      %c0_13 = arith.constant 0 : index
      %14 = vector.load %arg5[%c0_12, %c0_13] : memref<128x128xbf16, #tpu.memory_space<vmem>>, vector<128x128xbf16>
      %cst_14 = arith.constant dense<0.000000e+00> : vector<128x128xf32>
      %15 = tpu.matmul %13, %14, %cst_14 {dimension_numbers = #tpu.dot_dimension_numbers<[1], [0], [0], [1], [0, 0, 1, 1], [], []>} : vector<128x128xbf16>, vector<128x128xbf16>, vector<128x128xf32> -> vector<128x128xf32>
      %c0_15 = arith.constant 0 : index
      %c0_16 = arith.constant 0 : index
      %16 = vector.load %arg4[%c0_15, %c0_16] : memref<128x128xbf16, #tpu.memory_space<vmem>>, vector<128x128xbf16>
      %c0_17 = arith.constant 0 : index
      %c0_18 = arith.constant 0 : index
      %17 = vector.load %arg6[%c0_17, %c0_18] : memref<128x128xbf16, #tpu.memory_space<vmem>>, vector<128x128xbf16>
      %cst_19 = arith.constant dense<0.000000e+00> : vector<128x128xf32>
      %18 = tpu.matmul %16, %17, %cst_19 {dimension_numbers = #tpu.dot_dimension_numbers<[1], [0], [0], [1], [0, 0, 1, 1], [], []>} : vector<128x128xbf16>, vector<128x128xbf16>, vector<128x128xf32> -> vector<128x128xf32>
      %19 = arith.addf %15, %18 : vector<128x128xf32>
      %c0_20 = arith.constant 0 : index
      %c0_21 = arith.constant 0 : index
      %20 = vector.load %arg7[%c0_20, %c0_21] : memref<1x128xf32, #tpu.memory_space<vmem>>, vector<1x128xf32>
      %21 = vector.broadcast %20 : vector<1x128xf32> to vector<128x128xf32>
      %22 = arith.addf %19, %21 : vector<128x128xf32>
      %23 = arith.truncf %22 : vector<128x128xf32> to vector<128x128xbf16>
      %c0_22 = arith.constant 0 : index
      %c0_23 = arith.constant 0 : index
      %24 = vector.load %arg8[%c0_22, %c0_23] : memref<128x128xbf16, #tpu.memory_space<vmem>>, vector<128x128xbf16>
      tpu.vector_store %arg8[%c0_22, %c0_23], %23 {strides = array<i32>} : memref<128x128xbf16, #tpu.memory_space<vmem>>, vector<128x128xbf16>,
    } else {
    }
    return
  }
  func.func @transform_0(%arg0: i32, %arg1: i32) -> (i32, i32) {
    %c0_i32 = arith.constant 0 : i32
    return %arg0, %arg1 : i32, i32
  }
  func.func @transform_1(%arg0: i32, %arg1: i32) -> (i32, i32) {
    %c0_i32 = arith.constant 0 : i32
    %c0_i32_0 = arith.constant 0 : i32
    return %arg1, %c0_i32 : i32, i32
  }
  func.func @transform_2(%arg0: i32, %arg1: i32) -> (i32, i32) {
    %c0_i32 = arith.constant 0 : i32
    %c0_i32_0 = arith.constant 0 : i32
    return %arg0, %c0_i32 : i32, i32
  }
  func.func @transform_3(%arg0: i32, %arg1: i32) -> (i32, i32) {
    %c0_i32 = arith.constant 0 : i32
    %c0_i32_0 = arith.constant 0 : i32
    %c0_i32_1 = arith.constant 0 : i32
    return %c0_i32, %c0_i32_0 : i32, i32
  }
  func.func @transform_4(%arg0: i32, %arg1: i32) -> (i32, i32) {
    %c0_i32 = arith.constant 0 : i32
    %c0_i32_0 = arith.constant 0 : i32
    %c0_i32_1 = arith.constant 0 : i32
    return %c0_i32, %c0_i32_0 : i32, i32
  }
  func.func @transform_5(%arg0: i32, %arg1: i32) -> (i32, i32) {
    %c0_i32 = arith.constant 0 : i32
    %c0_i32_0 = arith.constant 0 : i32
    %c0_i32_1 = arith.constant 0 : i32
    return %c0_i32, %c0_i32_0 : i32, i32
  }
  func.func @transform_6(%arg0: i32, %arg1: i32) -> (i32, i32) {
    %c0_i32 = arith.constant 0 : i32
    %c0_i32_0 = arith.constant 0 : i32
    return %arg0, %c0_i32 : i32, i32
  }
}

module attributes {stable_mosaic.version = 11 : i64} {
  func.func @_dot_decoder_kernel(%arg0: i32, %arg1: memref<128x128xbf16, #tpu.memory_space<vmem>>, %arg2: memref<128x128xbf16, #tpu.memory_space<vmem>>, %arg3: memref<1x128xf32, #tpu.memory_space<vmem>>) attributes {dimension_semantics = [#tpu.dimension_semantics<parallel>], iteration_bounds = array<i64: 1>, scalar_prefetch = 0 : i64, scratch_operands = 0 : i64, tpu.core_type = #tpu.core_type<tc>, window_params = [{transform_indices = @transform_0, window_bounds = array<i64: 128, 128>}, {transform_indices = @transform_1, window_bounds = array<i64: 128, 128>}, {transform_indices = @transform_2, window_bounds = array<i64: 1, 128>}]} {
    %c0 = arith.constant 0 : index
    %c0_0 = arith.constant 0 : index
    %0 = vector.load %arg1[%c0, %c0_0] : memref<128x128xbf16, #tpu.memory_space<vmem>>, vector<128x128xbf16>
    %1 = arith.extf %0 : vector<128x128xbf16> to vector<128x128xf32>
    %c0_1 = arith.constant 0 : index
    %c0_2 = arith.constant 0 : index
    %2 = vector.load %arg2[%c0_1, %c0_2] : memref<128x128xbf16, #tpu.memory_space<vmem>>, vector<128x128xbf16>
    %3 = arith.extf %2 : vector<128x128xbf16> to vector<128x128xf32>
    %4 = arith.mulf %1, %3 : vector<128x128xf32>
    %cst = arith.constant dense<0.000000e+00> : vector<128xf32>
    %5 = vector.multi_reduction <add>, %4, %cst [0] : vector<128x128xf32> to vector<128xf32>
    %6 = vector.shape_cast %5 : vector<128xf32> to vector<1x128xf32>
    %c0_3 = arith.constant 0 : index
    %c0_4 = arith.constant 0 : index
    %7 = vector.load %arg3[%c0_3, %c0_4] : memref<1x128xf32, #tpu.memory_space<vmem>>, vector<1x128xf32>
    tpu.vector_store %arg3[%c0_3, %c0_4], %6 {strides = array<i32>} : memref<1x128xf32, #tpu.memory_space<vmem>>, vector<1x128xf32>,
    return
  }
  func.func @transform_0(%arg0: i32) -> (i32, i32) {
    %c0_i32 = arith.constant 0 : i32
    %c0_i32_0 = arith.constant 0 : i32
    return %c0_i32, %arg0 : i32, i32
  }
  func.func @transform_1(%arg0: i32) -> (i32, i32) {
    %c0_i32 = arith.constant 0 : i32
    %c0_i32_0 = arith.constant 0 : i32
    return %c0_i32, %arg0 : i32, i32
  }
  func.func @transform_2(%arg0: i32) -> (i32, i32) {
    %c0_i32 = arith.constant 0 : i32
    %c0_i32_0 = arith.constant 0 : i32
    return %c0_i32, %arg0 : i32, i32
  }
}

</mosaic_0001>

<llo_original>
// kernel: hetero_graphsage_forward.11
$region0: #{hetero_graphsage_forward.11}
  #allocation0 [shape = 'u32[]', space=smem, size = 0x4, offset = 0x4, fixed_abs, tag = 'smem constant byte address 0x4 - core index']
  #allocation1 [shape = 'u32[144,128]{1,0:T(1,128)}', space=vmem, size = 0x12000, scoped, tag = 'internal scratch']
  #allocation2 [shape = 'f32[128,128]{1,0:T(8,128)}', space=vmem, size = 0x10000, scoped, tag = 'scratch operand']
  %s0 = inlined_call_operand.vmem [shape: bf16[128,128], index: 0, kind: input, shape index: {}]
  %s1 = inlined_call_operand.vmem [shape: bf16[128,128], index: 1, kind: input, shape index: {}]
  %s2 = inlined_call_operand.vmem [shape: bf16[128,128], index: 2, kind: input, shape index: {}]
  %s3 = inlined_call_operand.vmem [shape: bf16[128,128], index: 3, kind: input, shape index: {}]
  %s4 = inlined_call_operand.vmem [shape: bf16[128,128], index: 4, kind: input, shape index: {}]
  %s5 = inlined_call_operand.vmem [shape: f32[1,128], index: 5, kind: input, shape index: {}]
  %s6 = inlined_call_operand.vmem [shape: bf16[128,128], index: 6, kind: output, shape index: {}]
  %s7 = sld [smem:[#allocation0]]
  $region42: #{hetero_graphsage_forward.11} parent=0
    _
  %s9 = ssub.s32 1, %s7
  %s10 = scalar_select 0, %s9, %s7
  // Predicated region
  $region2: #{hetero_graphsage_forward.11} parent=0 // pred_check
    _
  $region3: #{hetero_graphsage_forward.11} parent=0 // pred_check_branch
    %12 = sbr.rel (0) target = $region5
  $region4: #{hetero_graphsage_forward.11} parent=0 // pred_region
    _
  $region5: #{hetero_graphsage_forward.11} parent=0 // pred_fallthru
    _
  // Predicated region
  $region6: #{hetero_graphsage_forward.11} parent=0 // pred_check
    _
  $region7: #{hetero_graphsage_forward.11} parent=0 // pred_check_branch
    %14 = sbr.rel (0) target = $region9
  $region8: #{hetero_graphsage_forward.11} parent=0 // pred_region
    _
  $region9: #{hetero_graphsage_forward.11} parent=0 // pred_fallthru
    _
  // Predicated region
  $region10: #{hetero_graphsage_forward.11} parent=0 // pred_check
    _
  $region11: #{hetero_graphsage_forward.11} parent=0 // pred_check_branch
    %16 = sbr.rel (0) target = $region13
  $region12: #{hetero_graphsage_forward.11} parent=0 // pred_region
    _
  $region13: #{hetero_graphsage_forward.11} parent=0 // pred_fallthru
    _
  // Predicated region
  $region14: #{hetero_graphsage_forward.11} parent=0 // pred_check
    _
  $region15: #{hetero_graphsage_forward.11} parent=0 // pred_check_branch
    %18 = sbr.rel (0) target = $region17
  $region16: #{hetero_graphsage_forward.11} parent=0 // pred_region
    _
  $region17: #{hetero_graphsage_forward.11} parent=0 // pred_fallthru
    _
  // Predicated region
  $region18: #{hetero_graphsage_forward.11} parent=0 // pred_check
    _
  $region19: #{hetero_graphsage_forward.11} parent=0 // pred_check_branch
    %20 = sbr.rel (0) target = $region21
  $region20: #{hetero_graphsage_forward.11} parent=0 // pred_region
    _
  $region21: #{hetero_graphsage_forward.11} parent=0 // pred_fallthru
    _
  // Predicated region
  $region22: #{hetero_graphsage_forward.11} parent=0 // pred_check
    _
  $region23: #{hetero_graphsage_forward.11} parent=0 // pred_check_branch
    %22 = sbr.rel (0) target = $region25
  $region24: #{hetero_graphsage_forward.11} parent=0 // pred_region
    _
  $region25: #{hetero_graphsage_forward.11} parent=0 // pred_fallthru
    _
  %p24 = scmp.eq.s32.totalorder 0, 0
  // Predicated region
  $region26: #{hetero_graphsage_forward.11} parent=0 // pred_check
    %p25 = pneg %p24
  $region27: #{hetero_graphsage_forward.11} parent=0 // pred_check_branch
    %27 = sbr.rel (%p25) target = $region29
  $region28: #{hetero_graphsage_forward.11} parent=0 // pred_region
    %28 = vst [vmem:[#allocation2] sm:$0xff] 0.0
    %29 = vst [vmem:[#allocation2 + $0x8] sm:$0xff] 0.0
    %30 = vst [vmem:[#allocation2 + $0x10] sm:$0xff] 0.0
    %31 = vst [vmem:[#allocation2 + $0x18] sm:$0xff] 0.0
    %32 = vst [vmem:[#allocation2 + $0x20] sm:$0xff] 0.0
    %33 = vst [vmem:[#allocation2 + $0x28] sm:$0xff] 0.0
    %34 = vst [vmem:[#allocation2 + $0x30] sm:$0xff] 0.0
    %35 = vst [vmem:[#allocation2 + $0x38] sm:$0xff] 0.0
    %36 = vst [vmem:[#allocation2 + $0x40] sm:$0xff] 0.0
    %37 = vst [vmem:[#allocation2 + $0x48] sm:$0xff] 0.0
    %38 = vst [vmem:[#allocation2 + $0x50] sm:$0xff] 0.0
    %39 = vst [vmem:[#allocation2 + $0x58] sm:$0xff] 0.0
    %40 = vst [vmem:[#allocation2 + $0x60] sm:$0xff] 0.0
    %41 = vst [vmem:[#allocation2 + $0x68] sm:$0xff] 0.0
    %42 = vst [vmem:[#allocation2 + $0x70] sm:$0xff] 0.0
    %43 = vst [vmem:[#allocation2 + $0x78] sm:$0xff] 0.0
  $region29: #{hetero_graphsage_forward.11} parent=0 // pred_fallthru
    _
  %v44 = vld [vmem:[#allocation2] sm:$0xff]
  %v45 = vld [vmem:[#allocation2 + $0x8] sm:$0xff]
  %v46 = vld [vmem:[#allocation2 + $0x10] sm:$0xff]
  %v47 = vld [vmem:[#allocation2 + $0x18] sm:$0xff]
  %v48 = vld [vmem:[#allocation2 + $0x20] sm:$0xff]
  %v49 = vld [vmem:[#allocation2 + $0x28] sm:$0xff]
  %v50 = vld [vmem:[#allocation2 + $0x30] sm:$0xff]
  %v51 = vld [vmem:[#allocation2 + $0x38] sm:$0xff]
  %v52 = vld [vmem:[#allocation2 + $0x40] sm:$0xff]
  %v53 = vld [vmem:[#allocation2 + $0x48] sm:$0xff]
  %v54 = vld [vmem:[#allocation2 + $0x50] sm:$0xff]
  %v55 = vld [vmem:[#allocation2 + $0x58] sm:$0xff]
  %v56 = vld [vmem:[#allocation2 + $0x60] sm:$0xff]
  %v57 = vld [vmem:[#allocation2 + $0x68] sm:$0xff]
  %v58 = vld [vmem:[#allocation2 + $0x70] sm:$0xff]
  %v59 = vld [vmem:[#allocation2 + $0x78] sm:$0xff]
  %v60 = vld [vmem:[%s0] sm:$0xf]
  %v61 = vld [vmem:[%s0 + $0x4] sm:$0xf]
  %v62 = vld [vmem:[%s0 + $0x8] sm:$0xf]
  %v63 = vld [vmem:[%s0 + $0xc] sm:$0xf]
  %v64 = vld [vmem:[%s0 + $0x10] sm:$0xf]
  %v65 = vld [vmem:[%s0 + $0x14] sm:$0xf]
  %v66 = vld [vmem:[%s0 + $0x18] sm:$0xf]
  %v67 = vld [vmem:[%s0 + $0x1c] sm:$0xf]
  %v68 = vld [vmem:[%s0 + $0x20] sm:$0xf]
  %v69 = vld [vmem:[%s0 + $0x24] sm:$0xf]
  %v70 = vld [vmem:[%s0 + $0x28] sm:$0xf]
  %v71 = vld [vmem:[%s0 + $0x2c] sm:$0xf]
  %v72 = vld [vmem:[%s0 + $0x30] sm:$0xf]
  %v73 = vld [vmem:[%s0 + $0x34] sm:$0xf]
  %v74 = vld [vmem:[%s0 + $0x38] sm:$0xf]
  %v75 = vld [vmem:[%s0 + $0x3c] sm:$0xf]
  %v76 = vld [vmem:[%s1] sm:$0xf]
  %v77 = vld [vmem:[%s1 + $0x4] sm:$0xf]
  %v78 = vld [vmem:[%s1 + $0x8] sm:$0xf]
  %v79 = vld [vmem:[%s1 + $0xc] sm:$0xf]
  %v80 = vld [vmem:[%s1 + $0x10] sm:$0xf]
  %v81 = vld [vmem:[%s1 + $0x14] sm:$0xf]
  %v82 = vld [vmem:[%s1 + $0x18] sm:$0xf]
  %v83 = vld [vmem:[%s1 + $0x1c] sm:$0xf]
  %v84 = vld [vmem:[%s1 + $0x20] sm:$0xf]
  %v85 = vld [vmem:[%s1 + $0x24] sm:$0xf]
  %v86 = vld [vmem:[%s1 + $0x28] sm:$0xf]
  %v87 = vld [vmem:[%s1 + $0x2c] sm:$0xf]
  %v88 = vld [vmem:[%s1 + $0x30] sm:$0xf]
  %v89 = vld [vmem:[%s1 + $0x34] sm:$0xf]
  %v90 = vld [vmem:[%s1 + $0x38] sm:$0xf]
  %v91 = vld [vmem:[%s1 + $0x3c] sm:$0xf]
  %v108 = vunpack.c.l.b16 %v60
  %v109 = vunpack.c.l.b16 %v61
  %v110 = vunpack.c.l.b16 %v62
  %v111 = vunpack.c.l.b16 %v63
  %v112 = vunpack.c.l.b16 %v64
  %v113 = vunpack.c.l.b16 %v65
  %v114 = vunpack.c.l.b16 %v66
  %v115 = vunpack.c.l.b16 %v67
  %v116 = vunpack.c.l.b16 %v68
  %v117 = vunpack.c.l.b16 %v69
  %v118 = vunpack.c.l.b16 %v70
  %v119 = vunpack.c.l.b16 %v71
  %v120 = vunpack.c.l.b16 %v72
  %v121 = vunpack.c.l.b16 %v73
  %v122 = vunpack.c.l.b16 %v74
  %v123 = vunpack.c.l.b16 %v75
  %v124 = vpack.c.b16 %v109, %v108
  %v125 = vpack.c.b16 %v111, %v110
  %v126 = vpack.c.b16 %v113, %v112
  %v127 = vpack.c.b16 %v115, %v114
  %v128 = vpack.c.b16 %v117, %v116
  %v129 = vpack.c.b16 %v119, %v118
  %v130 = vpack.c.b16 %v121, %v120
  %v131 = vpack.c.b16 %v123, %v122
  %v156 = vunpack.c.l.b16 %v76
  %v157 = vunpack.c.l.b16 %v77
  %v158 = vunpack.c.l.b16 %v78
  %v159 = vunpack.c.l.b16 %v79
  %v160 = vunpack.c.l.b16 %v80
  %v161 = vunpack.c.l.b16 %v81
  %v162 = vunpack.c.l.b16 %v82
  %v163 = vunpack.c.l.b16 %v83
  %v164 = vunpack.c.l.b16 %v84
  %v165 = vunpack.c.l.b16 %v85
  %v166 = vunpack.c.l.b16 %v86
  %v167 = vunpack.c.l.b16 %v87
  %v168 = vunpack.c.l.b16 %v88
  %v169 = vunpack.c.l.b16 %v89
  %v170 = vunpack.c.l.b16 %v90
  %v171 = vunpack.c.l.b16 %v91
  %v172 = vpack.c.b16 %v157, %v156
  %v173 = vpack.c.b16 %v159, %v158
  %v174 = vpack.c.b16 %v161, %v160
  %v175 = vpack.c.b16 %v163, %v162
  %v176 = vpack.c.b16 %v165, %v164
  %v177 = vpack.c.b16 %v167, %v166
  %v178 = vpack.c.b16 %v169, %v168
  %v179 = vpack.c.b16 %v171, %v170
  %188 = vmatprep.subr.bf16.mxu0 0
  %189 = vmatpush1.bf16.msra.mxu0 %v172
  %190 = vmatprep.subr.bf16.mxu0 0
  %191 = vmatpush1.bf16.msra.mxu0 %v173
  %192 = vmatprep.subr.bf16.mxu0 0
  %193 = vmatpush1.bf16.msra.mxu0 %v174
  %194 = vmatprep.subr.bf16.mxu0 0
  %195 = vmatpush1.bf16.msra.mxu0 %v175
  %196 = vmatprep.subr.bf16.mxu0 0
  %197 = vmatpush1.bf16.msra.mxu0 %v176
  %198 = vmatprep.subr.bf16.mxu0 0
  %199 = vmatpush1.bf16.msra.mxu0 %v177
  %200 = vmatprep.subr.bf16.mxu0 0
  %201 = vmatpush1.bf16.msra.mxu0 %v178
  %202 = vmatprep.subr.bf16.mxu0 0
  %203 = vmatpush1.bf16.msra.mxu0 %v179
  %204 = vmatprep.subr.bf16.mxu0 0
  %205 = vmatpush1.bf16.msra.mxu0 0
  %206 = vmatprep.subr.bf16.mxu0 0
  %207 = vmatpush1.bf16.msra.mxu0 0
  %208 = vmatprep.subr.bf16.mxu0 0
  %209 = vmatpush1.bf16.msra.mxu0 0
  %210 = vmatprep.subr.bf16.mxu0 0
  %211 = vmatpush1.bf16.msra.mxu0 0
  %212 = vmatprep.subr.bf16.mxu0 0
  %213 = vmatpush1.bf16.msra.mxu0 0
  %214 = vmatprep.subr.bf16.mxu0 0
  %215 = vmatpush1.bf16.msra.mxu0 0
  %216 = vmatprep.subr.bf16.mxu0 0
  %217 = vmatpush1.bf16.msra.mxu0 0
  %218 = vmatprep.subr.bf16.mxu0 0
  %219 = vmatpush1.bf16.msra.mxu0 0
  %220 = vmatprep.mubr.bf16.mxu0 0
  %221 = vmatmul.mubr.bf16.gmra.mrb[0].mxu0 %v124
  %v222 = vpop.f32.mrb[0].mxu0
  %v223 = vadd.f32 0.0, %v222
  %v224 = vpop.f32.mrb[0].mxu0
  %v225 = vpop.f32.mrb[0].mxu0
  %v226 = vadd.f32 0.0, %v225
  %v227 = vpop.f32.mrb[0].mxu0
  %228 = vmatprep.mubr.bf16.mxu0 0
  %229 = vmatmul.mubr.bf16.gmra.mrb[0].mxu0 %v125
  %v230 = vpop.f32.mrb[0].mxu0
  %v231 = vadd.f32 0.0, %v230
  %v232 = vpop.f32.mrb[0].mxu0
  %v233 = vpop.f32.mrb[0].mxu0
  %v234 = vadd.f32 0.0, %v233
  %v235 = vpop.f32.mrb[0].mxu0
  %236 = vmatprep.mubr.bf16.mxu0 0
  %237 = vmatmul.mubr.bf16.gmra.mrb[0].mxu0 %v126
  %v238 = vpop.f32.mrb[0].mxu0
  %v239 = vadd.f32 0.0, %v238
  %v240 = vpop.f32.mrb[0].mxu0
  %v241 = vpop.f32.mrb[0].mxu0
  %v242 = vadd.f32 0.0, %v241
  %v243 = vpop.f32.mrb[0].mxu0
  %244 = vmatprep.mubr.bf16.mxu0 0
  %245 = vmatmul.mubr.bf16.gmra.mrb[0].mxu0 %v127
  %v246 = vpop.f32.mrb[0].mxu0
  %v247 = vadd.f32 0.0, %v246
  %v248 = vpop.f32.mrb[0].mxu0
  %v249 = vpop.f32.mrb[0].mxu0
  %v250 = vadd.f32 0.0, %v249
  %v251 = vpop.f32.mrb[0].mxu0
  %252 = vmatprep.mubr.bf16.mxu0 0
  %253 = vmatmul.mubr.bf16.gmra.mrb[0].mxu0 %v128
  %v254 = vpop.f32.mrb[0].mxu0
  %v255 = vadd.f32 0.0, %v254
  %v256 = vpop.f32.mrb[0].mxu0
  %v257 = vpop.f32.mrb[0].mxu0
  %v258 = vadd.f32 0.0, %v257
  %v259 = vpop.f32.mrb[0].mxu0
  %260 = vmatprep.mubr.bf16.mxu0 0
  %261 = vmatmul.mubr.bf16.gmra.mrb[0].mxu0 %v129
  %v262 = vpop.f32.mrb[0].mxu0
  %v263 = vadd.f32 0.0, %v262
  %v264 = vpop.f32.mrb[0].mxu0
  %v265 = vpop.f32.mrb[0].mxu0
  %v266 = vadd.f32 0.0, %v265
  %v267 = vpop.f32.mrb[0].mxu0
  %268 = vmatprep.mubr.bf16.mxu0 0
  %269 = vmatmul.mubr.bf16.gmra.mrb[0].mxu0 %v130
  %v270 = vpop.f32.mrb[0].mxu0
  %v271 = vadd.f32 0.0, %v270
  %v272 = vpop.f32.mrb[0].mxu0
  %v273 = vpop.f32.mrb[0].mxu0
  %v274 = vadd.f32 0.0, %v273
  %v275 = vpop.f32.mrb[0].mxu0
  %276 = vmatprep.mubr.bf16.mxu0 0
  %277 = vmatmul.mubr.bf16.gmra.mrb[0].mxu0 %v131
  %v278 = vpop.f32.mrb[0].mxu0
  %v279 = vadd.f32 0.0, %v278
  %v280 = vpop.f32.mrb[0].mxu0
  %v281 = vpop.f32.mrb[0].mxu0
  %v282 = vadd.f32 0.0, %v281
  %v283 = vpop.f32.mrb[0].mxu0
  %284 = vdwg.mxu0
  %v285 = vadd.f32 %v44, %v223
  %v286 = vadd.f32 %v45, %v226
  %v287 = vadd.f32 %v46, %v231
  %v288 = vadd.f32 %v47, %v234
  %v289 = vadd.f32 %v48, %v239
  %v290 = vadd.f32 %v49, %v242
  %v291 = vadd.f32 %v50, %v247
  %v292 = vadd.f32 %v51, %v250
  %v293 = vadd.f32 %v52, %v255
  %v294 = vadd.f32 %v53, %v258
  %v295 = vadd.f32 %v54, %v263
  %v296 = vadd.f32 %v55, %v266
  %v297 = vadd.f32 %v56, %v271
  %v298 = vadd.f32 %v57, %v274
  %v299 = vadd.f32 %v58, %v279
  %v300 = vadd.f32 %v59, %v282
  %301 = vst [vmem:[#allocation2] sm:$0xff] %v285
  %302 = vst [vmem:[#allocation2 + $0x8] sm:$0xff] %v286
  %303 = vst [vmem:[#allocation2 + $0x10] sm:$0xff] %v287
  %304 = vst [vmem:[#allocation2 + $0x18] sm:$0xff] %v288
  %305 = vst [vmem:[#allocation2 + $0x20] sm:$0xff] %v289
  %306 = vst [vmem:[#allocation2 + $0x28] sm:$0xff] %v290
  %307 = vst [vmem:[#allocation2 + $0x30] sm:$0xff] %v291
  %308 = vst [vmem:[#allocation2 + $0x38] sm:$0xff] %v292
  %309 = vst [vmem:[#allocation2 + $0x40] sm:$0xff] %v293
  %310 = vst [vmem:[#allocation2 + $0x48] sm:$0xff] %v294
  %311 = vst [vmem:[#allocation2 + $0x50] sm:$0xff] %v295
  %312 = vst [vmem:[#allocation2 + $0x58] sm:$0xff] %v296
  %313 = vst [vmem:[#allocation2 + $0x60] sm:$0xff] %v297
  %314 = vst [vmem:[#allocation2 + $0x68] sm:$0xff] %v298
  %315 = vst [vmem:[#allocation2 + $0x70] sm:$0xff] %v299
  %316 = vst [vmem:[#allocation2 + $0x78] sm:$0xff] %v300
  // Predicated region
  $region30: #{hetero_graphsage_forward.11} parent=0 // pred_check
    %p317 = pneg %p24
  $region31: #{hetero_graphsage_forward.11} parent=0 // pred_check_branch
    %319 = sbr.rel (%p317) target = $region33
  $region32: #{hetero_graphsage_forward.11} parent=0 // pred_region
    %v320 = vld [vmem:[#allocation2] sm:$0xff]
    %v321 = vld [vmem:[#allocation2 + $0x8] sm:$0xff]
    %v322 = vld [vmem:[#allocation2 + $0x10] sm:$0xff]
    %v323 = vld [vmem:[#allocation2 + $0x18] sm:$0xff]
    %v324 = vld [vmem:[#allocation2 + $0x20] sm:$0xff]
    %v325 = vld [vmem:[#allocation2 + $0x28] sm:$0xff]
    %v326 = vld [vmem:[#allocation2 + $0x30] sm:$0xff]
    %v327 = vld [vmem:[#allocation2 + $0x38] sm:$0xff]
    %v328 = vld [vmem:[#allocation2 + $0x40] sm:$0xff]
    %v329 = vld [vmem:[#allocation2 + $0x48] sm:$0xff]
    %v330 = vld [vmem:[#allocation2 + $0x50] sm:$0xff]
    %v331 = vld [vmem:[#allocation2 + $0x58] sm:$0xff]
    %v332 = vld [vmem:[#allocation2 + $0x60] sm:$0xff]
    %v333 = vld [vmem:[#allocation2 + $0x68] sm:$0xff]
    %v334 = vld [vmem:[#allocation2 + $0x70] sm:$0xff]
    %v335 = vld [vmem:[#allocation2 + $0x78] sm:$0xff]
    %v336 = vpack.c.bf16 %v321, %v320
    %v337 = vpack.c.bf16 %v323, %v322
    %v338 = vpack.c.bf16 %v325, %v324
    %v339 = vpack.c.bf16 %v327, %v326
    %v340 = vpack.c.bf16 %v329, %v328
    %v341 = vpack.c.bf16 %v331, %v330
    %v342 = vpack.c.bf16 %v333, %v332
    %v343 = vpack.c.bf16 %v335, %v334
    %v344 = vld [vmem:[%s3] sm:$0xf]
    %v345 = vld [vmem:[%s3 + $0x4] sm:$0xf]
    %v346 = vld [vmem:[%s3 + $0x8] sm:$0xf]
    %v347 = vld [vmem:[%s3 + $0xc] sm:$0xf]
    %v348 = vld [vmem:[%s3 + $0x10] sm:$0xf]
    %v349 = vld [vmem:[%s3 + $0x14] sm:$0xf]
    %v350 = vld [vmem:[%s3 + $0x18] sm:$0xf]
    %v351 = vld [vmem:[%s3 + $0x1c] sm:$0xf]
    %v352 = vld [vmem:[%s3 + $0x20] sm:$0xf]
    %v353 = vld [vmem:[%s3 + $0x24] sm:$0xf]
    %v354 = vld [vmem:[%s3 + $0x28] sm:$0xf]
    %v355 = vld [vmem:[%s3 + $0x2c] sm:$0xf]
    %v356 = vld [vmem:[%s3 + $0x30] sm:$0xf]
    %v357 = vld [vmem:[%s3 + $0x34] sm:$0xf]
    %v358 = vld [vmem:[%s3 + $0x38] sm:$0xf]
    %v359 = vld [vmem:[%s3 + $0x3c] sm:$0xf]
    %v360 = vld [vmem:[%s2] sm:$0xf]
    %v361 = vld [vmem:[%s2 + $0x4] sm:$0xf]
    %v362 = vld [vmem:[%s2 + $0x8] sm:$0xf]
    %v363 = vld [vmem:[%s2 + $0xc] sm:$0xf]
    %v364 = vld [vmem:[%s2 + $0x10] sm:$0xf]
    %v365 = vld [vmem:[%s2 + $0x14] sm:$0xf]
    %v366 = vld [vmem:[%s2 + $0x18] sm:$0xf]
    %v367 = vld [vmem:[%s2 + $0x1c] sm:$0xf]
    %v368 = vld [vmem:[%s2 + $0x20] sm:$0xf]
    %v369 = vld [vmem:[%s2 + $0x24] sm:$0xf]
    %v370 = vld [vmem:[%s2 + $0x28] sm:$0xf]
    %v371 = vld [vmem:[%s2 + $0x2c] sm:$0xf]
    %v372 = vld [vmem:[%s2 + $0x30] sm:$0xf]
    %v373 = vld [vmem:[%s2 + $0x34] sm:$0xf]
    %v374 = vld [vmem:[%s2 + $0x38] sm:$0xf]
    %v375 = vld [vmem:[%s2 + $0x3c] sm:$0xf]
    %v376 = vld [vmem:[%s4] sm:$0xf]
    %v377 = vld [vmem:[%s4 + $0x4] sm:$0xf]
    %v378 = vld [vmem:[%s4 + $0x8] sm:$0xf]
    %v379 = vld [vmem:[%s4 + $0xc] sm:$0xf]
    %v380 = vld [vmem:[%s4 + $0x10] sm:$0xf]
    %v381 = vld [vmem:[%s4 + $0x14] sm:$0xf]
    %v382 = vld [vmem:[%s4 + $0x18] sm:$0xf]
    %v383 = vld [vmem:[%s4 + $0x1c] sm:$0xf]
    %v384 = vld [vmem:[%s4 + $0x20] sm:$0xf]
    %v385 = vld [vmem:[%s4 + $0x24] sm:$0xf]
    %v386 = vld [vmem:[%s4 + $0x28] sm:$0xf]
    %v387 = vld [vmem:[%s4 + $0x2c] sm:$0xf]
    %v388 = vld [vmem:[%s4 + $0x30] sm:$0xf]
    %v389 = vld [vmem:[%s4 + $0x34] sm:$0xf]
    %v390 = vld [vmem:[%s4 + $0x38] sm:$0xf]
    %v391 = vld [vmem:[%s4 + $0x3c] sm:$0xf]
    %v408 = vunpack.c.l.b16 %v360
    %v409 = vunpack.c.l.b16 %v361
    %v410 = vunpack.c.l.b16 %v362
    %v411 = vunpack.c.l.b16 %v363
    %v412 = vunpack.c.l.b16 %v364
    %v413 = vunpack.c.l.b16 %v365
    %v414 = vunpack.c.l.b16 %v366
    %v415 = vunpack.c.l.b16 %v367
    %v416 = vunpack.c.l.b16 %v368
    %v417 = vunpack.c.l.b16 %v369
    %v418 = vunpack.c.l.b16 %v370
    %v419 = vunpack.c.l.b16 %v371
    %v420 = vunpack.c.l.b16 %v372
    %v421 = vunpack.c.l.b16 %v373
    %v422 = vunpack.c.l.b16 %v374
    %v423 = vunpack.c.l.b16 %v375
    %v424 = vpack.c.b16 %v409, %v408
    %v425 = vpack.c.b16 %v411, %v410
    %v426 = vpack.c.b16 %v413, %v412
    %v427 = vpack.c.b16 %v415, %v414
    %v428 = vpack.c.b16 %v417, %v416
    %v429 = vpack.c.b16 %v419, %v418
    %v430 = vpack.c.b16 %v421, %v420
    %v431 = vpack.c.b16 %v423, %v422
    %v456 = vunpack.c.l.b16 %v376
    %v457 = vunpack.c.l.b16 %v377
    %v458 = vunpack.c.l.b16 %v378
    %v459 = vunpack.c.l.b16 %v379
    %v460 = vunpack.c.l.b16 %v380
    %v461 = vunpack.c.l.b16 %v381
    %v462 = vunpack.c.l.b16 %v382
    %v463 = vunpack.c.l.b16 %v383
    %v464 = vunpack.c.l.b16 %v384
    %v465 = vunpack.c.l.b16 %v385
    %v466 = vunpack.c.l.b16 %v386
    %v467 = vunpack.c.l.b16 %v387
    %v468 = vunpack.c.l.b16 %v388
    %v469 = vunpack.c.l.b16 %v389
    %v470 = vunpack.c.l.b16 %v390
    %v471 = vunpack.c.l.b16 %v391
    %v472 = vpack.c.b16 %v457, %v456
    %v473 = vpack.c.b16 %v459, %v458
    %v474 = vpack.c.b16 %v461, %v460
    %v475 = vpack.c.b16 %v463, %v462
    %v476 = vpack.c.b16 %v465, %v464
    %v477 = vpack.c.b16 %v467, %v466
    %v478 = vpack.c.b16 %v469, %v468
    %v479 = vpack.c.b16 %v471, %v470
    %488 = vmatprep.subr.bf16.mxu0 0
    %489 = vmatpush1.bf16.msra.mxu0 %v472
    %490 = vmatprep.subr.bf16.mxu0 0
    %491 = vmatpush1.bf16.msra.mxu0 %v473
    %492 = vmatprep.subr.bf16.mxu0 0
    %493 = vmatpush1.bf16.msra.mxu0 %v474
    %494 = vmatprep.subr.bf16.mxu0 0
    %495 = vmatpush1.bf16.msra.mxu0 %v475
    %496 = vmatprep.subr.bf16.mxu0 0
    %497 = vmatpush1.bf16.msra.mxu0 %v476
    %498 = vmatprep.subr.bf16.mxu0 0
    %499 = vmatpush1.bf16.msra.mxu0 %v477
    %500 = vmatprep.subr.bf16.mxu0 0
    %501 = vmatpush1.bf16.msra.mxu0 %v478
    %502 = vmatprep.subr.bf16.mxu0 0
    %503 = vmatpush1.bf16.msra.mxu0 %v479
    %504 = vmatprep.subr.bf16.mxu0 0
    %505 = vmatpush1.bf16.msra.mxu0 0
    %506 = vmatprep.subr.bf16.mxu0 0
    %507 = vmatpush1.bf16.msra.mxu0 0
    %508 = vmatprep.subr.bf16.mxu0 0
    %509 = vmatpush1.bf16.msra.mxu0 0
    %510 = vmatprep.subr.bf16.mxu0 0
    %511 = vmatpush1.bf16.msra.mxu0 0
    %512 = vmatprep.subr.bf16.mxu0 0
    %513 = vmatpush1.bf16.msra.mxu0 0
    %514 = vmatprep.subr.bf16.mxu0 0
    %515 = vmatpush1.bf16.msra.mxu0 0
    %516 = vmatprep.subr.bf16.mxu0 0
    %517 = vmatpush1.bf16.msra.mxu0 0
    %518 = vmatprep.subr.bf16.mxu0 0
    %519 = vmatpush1.bf16.msra.mxu0 0
    %520 = vmatprep.mubr.bf16.mxu0 0
    %521 = vmatmul.mubr.bf16.gmra.mrb[0].mxu0 %v424
    %v522 = vpop.f32.mrb[0].mxu0
    %v523 = vadd.f32 0.0, %v522
    %v524 = vpop.f32.mrb[0].mxu0
    %v525 = vpop.f32.mrb[0].mxu0
    %v526 = vadd.f32 0.0, %v525
    %v527 = vpop.f32.mrb[0].mxu0
    %528 = vmatprep.mubr.bf16.mxu0 0
    %529 = vmatmul.mubr.bf16.gmra.mrb[0].mxu0 %v425
    %v530 = vpop.f32.mrb[0].mxu0
    %v531 = vadd.f32 0.0, %v530
    %v532 = vpop.f32.mrb[0].mxu0
    %v533 = vpop.f32.mrb[0].mxu0
    %v534 = vadd.f32 0.0, %v533
    %v535 = vpop.f32.mrb[0].mxu0
    %536 = vmatprep.mubr.bf16.mxu0 0
    %537 = vmatmul.mubr.bf16.gmra.mrb[0].mxu0 %v426
    %v538 = vpop.f32.mrb[0].mxu0
    %v539 = vadd.f32 0.0, %v538
    %v540 = vpop.f32.mrb[0].mxu0
    %v541 = vpop.f32.mrb[0].mxu0
    %v542 = vadd.f32 0.0, %v541
    %v543 = vpop.f32.mrb[0].mxu0
    %544 = vmatprep.mubr.bf16.mxu0 0
    %545 = vmatmul.mubr.bf16.gmra.mrb[0].mxu0 %v427
    %v546 = vpop.f32.mrb[0].mxu0
    %v547 = vadd.f32 0.0, %v546
    %v548 = vpop.f32.mrb[0].mxu0
    %v549 = vpop.f32.mrb[0].mxu0
    %v550 = vadd.f32 0.0, %v549
    %v551 = vpop.f32.mrb[0].mxu0
    %552 = vmatprep.mubr.bf16.mxu0 0
    %553 = vmatmul.mubr.bf16.gmra.mrb[0].mxu0 %v428
    %v554 = vpop.f32.mrb[0].mxu0
    %v555 = vadd.f32 0.0, %v554
    %v556 = vpop.f32.mrb[0].mxu0
    %v557 = vpop.f32.mrb[0].mxu0
    %v558 = vadd.f32 0.0, %v557
    %v559 = vpop.f32.mrb[0].mxu0
    %560 = vmatprep.mubr.bf16.mxu0 0
    %561 = vmatmul.mubr.bf16.gmra.mrb[0].mxu0 %v429
    %v562 = vpop.f32.mrb[0].mxu0
    %v563 = vadd.f32 0.0, %v562
    %v564 = vpop.f32.mrb[0].mxu0
    %v565 = vpop.f32.mrb[0].mxu0
    %v566 = vadd.f32 0.0, %v565
    %v567 = vpop.f32.mrb[0].mxu0
    %568 = vmatprep.mubr.bf16.mxu0 0
    %569 = vmatmul.mubr.bf16.gmra.mrb[0].mxu0 %v430
    %v570 = vpop.f32.mrb[0].mxu0
    %v571 = vadd.f32 0.0, %v570
    %v572 = vpop.f32.mrb[0].mxu0
    %v573 = vpop.f32.mrb[0].mxu0
    %v574 = vadd.f32 0.0, %v573
    %v575 = vpop.f32.mrb[0].mxu0
    %576 = vmatprep.mubr.bf16.mxu0 0
    %577 = vmatmul.mubr.bf16.gmra.mrb[0].mxu0 %v431
    %v578 = vpop.f32.mrb[0].mxu0
    %v579 = vadd.f32 0.0, %v578
    %v580 = vpop.f32.mrb[0].mxu0
    %v581 = vpop.f32.mrb[0].mxu0
    %v582 = vadd.f32 0.0, %v581
    %v583 = vpop.f32.mrb[0].mxu0
    %584 = vdwg.mxu0
    %v601 = vunpack.c.l.b16 %v344
    %v602 = vunpack.c.l.b16 %v345
    %v603 = vunpack.c.l.b16 %v346
    %v604 = vunpack.c.l.b16 %v347
    %v605 = vunpack.c.l.b16 %v348
    %v606 = vunpack.c.l.b16 %v349
    %v607 = vunpack.c.l.b16 %v350
    %v608 = vunpack.c.l.b16 %v351
    %v609 = vunpack.c.l.b16 %v352
    %v610 = vunpack.c.l.b16 %v353
    %v611 = vunpack.c.l.b16 %v354
    %v612 = vunpack.c.l.b16 %v355
    %v613 = vunpack.c.l.b16 %v356
    %v614 = vunpack.c.l.b16 %v357
    %v615 = vunpack.c.l.b16 %v358
    %v616 = vunpack.c.l.b16 %v359
    %v617 = vpack.c.b16 %v602, %v601
    %v618 = vpack.c.b16 %v604, %v603
    %v619 = vpack.c.b16 %v606, %v605
    %v620 = vpack.c.b16 %v608, %v607
    %v621 = vpack.c.b16 %v610, %v609
    %v622 = vpack.c.b16 %v612, %v611
    %v623 = vpack.c.b16 %v614, %v613
    %v624 = vpack.c.b16 %v616, %v615
    %633 = vmatprep.subr.bf16.mxu0 0
    %634 = vmatpush1.bf16.msra.mxu0 %v617
    %635 = vmatprep.subr.bf16.mxu0 0
    %636 = vmatpush1.bf16.msra.mxu0 %v618
    %637 = vmatprep.subr.bf16.mxu0 0
    %638 = vmatpush1.bf16.msra.mxu0 %v619
    %639 = vmatprep.subr.bf16.mxu0 0
    %640 = vmatpush1.bf16.msra.mxu0 %v620
    %641 = vmatprep.subr.bf16.mxu0 0
    %642 = vmatpush1.bf16.msra.mxu0 %v621
    %643 = vmatprep.subr.bf16.mxu0 0
    %644 = vmatpush1.bf16.msra.mxu0 %v622
    %645 = vmatprep.subr.bf16.mxu0 0
    %646 = vmatpush1.bf16.msra.mxu0 %v623
    %647 = vmatprep.subr.bf16.mxu0 0
    %648 = vmatpush1.bf16.msra.mxu0 %v624
    %649 = vmatprep.subr.bf16.mxu0 0
    %650 = vmatpush1.bf16.msra.mxu0 0
    %651 = vmatprep.subr.bf16.mxu0 0
    %652 = vmatpush1.bf16.msra.mxu0 0
    %653 = vmatprep.subr.bf16.mxu0 0
    %654 = vmatpush1.bf16.msra.mxu0 0
    %655 = vmatprep.subr.bf16.mxu0 0
    %656 = vmatpush1.bf16.msra.mxu0 0
    %657 = vmatprep.subr.bf16.mxu0 0
    %658 = vmatpush1.bf16.msra.mxu0 0
    %659 = vmatprep.subr.bf16.mxu0 0
    %660 = vmatpush1.bf16.msra.mxu0 0
    %661 = vmatprep.subr.bf16.mxu0 0
    %662 = vmatpush1.bf16.msra.mxu0 0
    %663 = vmatprep.subr.bf16.mxu0 0
    %664 = vmatpush1.bf16.msra.mxu0 0
    %665 = vmatprep.mubr.bf16.mxu0 0
    %666 = vmatmul.mubr.bf16.gmra.mrb[0].mxu0 %v336
    %v667 = vpop.f32.mrb[0].mxu0
    %v668 = vadd.f32 %v523, %v667
    %v669 = vpop.f32.mrb[0].mxu0
    %v670 = vpop.f32.mrb[0].mxu0
    %v671 = vadd.f32 %v526, %v670
    %v672 = vpop.f32.mrb[0].mxu0
    %673 = vmatprep.mubr.bf16.mxu0 0
    %674 = vmatmul.mubr.bf16.gmra.mrb[0].mxu0 %v337
    %v675 = vpop.f32.mrb[0].mxu0
    %v676 = vadd.f32 %v531, %v675
    %v677 = vpop.f32.mrb[0].mxu0
    %v678 = vpop.f32.mrb[0].mxu0
    %v679 = vadd.f32 %v534, %v678
    %v680 = vpop.f32.mrb[0].mxu0
    %681 = vmatprep.mubr.bf16.mxu0 0
    %682 = vmatmul.mubr.bf16.gmra.mrb[0].mxu0 %v338
    %v683 = vpop.f32.mrb[0].mxu0
    %v684 = vadd.f32 %v539, %v683
    %v685 = vpop.f32.mrb[0].mxu0
    %v686 = vpop.f32.mrb[0].mxu0
    %v687 = vadd.f32 %v542, %v686
    %v688 = vpop.f32.mrb[0].mxu0
    %689 = vmatprep.mubr.bf16.mxu0 0
    %690 = vmatmul.mubr.bf16.gmra.mrb[0].mxu0 %v339
    %v691 = vpop.f32.mrb[0].mxu0
    %v692 = vadd.f32 %v547, %v691
    %v693 = vpop.f32.mrb[0].mxu0
    %v694 = vpop.f32.mrb[0].mxu0
    %v695 = vadd.f32 %v550, %v694
    %v696 = vpop.f32.mrb[0].mxu0
    %697 = vmatprep.mubr.bf16.mxu0 0
    %698 = vmatmul.mubr.bf16.gmra.mrb[0].mxu0 %v340
    %v699 = vpop.f32.mrb[0].mxu0
    %v700 = vadd.f32 %v555, %v699
    %v701 = vpop.f32.mrb[0].mxu0
    %v702 = vpop.f32.mrb[0].mxu0
    %v703 = vadd.f32 %v558, %v702
    %v704 = vpop.f32.mrb[0].mxu0
    %705 = vmatprep.mubr.bf16.mxu0 0
    %706 = vmatmul.mubr.bf16.gmra.mrb[0].mxu0 %v341
    %v707 = vpop.f32.mrb[0].mxu0
    %v708 = vadd.f32 %v563, %v707
    %v709 = vpop.f32.mrb[0].mxu0
    %v710 = vpop.f32.mrb[0].mxu0
    %v711 = vadd.f32 %v566, %v710
    %v712 = vpop.f32.mrb[0].mxu0
    %713 = vmatprep.mubr.bf16.mxu0 0
    %714 = vmatmul.mubr.bf16.gmra.mrb[0].mxu0 %v342
    %v715 = vpop.f32.mrb[0].mxu0
    %v716 = vadd.f32 %v571, %v715
    %v717 = vpop.f32.mrb[0].mxu0
    %v718 = vpop.f32.mrb[0].mxu0
    %v719 = vadd.f32 %v574, %v718
    %v720 = vpop.f32.mrb[0].mxu0
    %721 = vmatprep.mubr.bf16.mxu0 0
    %722 = vmatmul.mubr.bf16.gmra.mrb[0].mxu0 %v343
    %v723 = vpop.f32.mrb[0].mxu0
    %v724 = vadd.f32 %v579, %v723
    %v725 = vpop.f32.mrb[0].mxu0
    %v726 = vpop.f32.mrb[0].mxu0
    %v727 = vadd.f32 %v582, %v726
    %v728 = vpop.f32.mrb[0].mxu0
    %729 = vdwg.mxu0
    %v730 = vld [vmem:[%s5] sm:$0x1]
    %v732 = vlaneseq
    %v733 = vshrl.u32 %v732, 7
    %v734 = vsub.s32 0, %v733
    %v735 = vrot.slane %v730, %v734
    %v737 = vadd.f32 %v668, %v735
    %v738 = vadd.f32 %v671, %v735
    %v739 = vadd.f32 %v676, %v735
    %v740 = vadd.f32 %v679, %v735
    %v741 = vadd.f32 %v684, %v735
    %v742 = vadd.f32 %v687, %v735
    %v743 = vadd.f32 %v692, %v735
    %v744 = vadd.f32 %v695, %v735
    %v745 = vadd.f32 %v700, %v735
    %v746 = vadd.f32 %v703, %v735
    %v747 = vadd.f32 %v708, %v735
    %v748 = vadd.f32 %v711, %v735
    %v749 = vadd.f32 %v716, %v735
    %v750 = vadd.f32 %v719, %v735
    %v751 = vadd.f32 %v724, %v735
    %v752 = vadd.f32 %v727, %v735
    %v753 = vpack.c.bf16 %v738, %v737
    %v754 = vpack.c.bf16 %v740, %v739
    %v755 = vpack.c.bf16 %v742, %v741
    %v756 = vpack.c.bf16 %v744, %v743
    %v757 = vpack.c.bf16 %v746, %v745
    %v758 = vpack.c.bf16 %v748, %v747
    %v759 = vpack.c.bf16 %v750, %v749
    %v760 = vpack.c.bf16 %v752, %v751
    %v769 = vunpack.c.l.b16 %v753
    %v770 = vunpack.c.h.b16 %v753
    %v771 = vunpack.c.l.b16 %v754
    %v772 = vunpack.c.h.b16 %v754
    %v773 = vunpack.c.l.b16 %v755
    %v774 = vunpack.c.h.b16 %v755
    %v775 = vunpack.c.l.b16 %v756
    %v776 = vunpack.c.h.b16 %v756
    %v777 = vunpack.c.l.b16 %v757
    %v778 = vunpack.c.h.b16 %v757
    %v779 = vunpack.c.l.b16 %v758
    %v780 = vunpack.c.h.b16 %v758
    %v781 = vunpack.c.l.b16 %v759
    %v782 = vunpack.c.h.b16 %v759
    %v783 = vunpack.c.l.b16 %v760
    %v784 = vunpack.c.h.b16 %v760
    %v785 = vpack.c.b16 %v769, %v769
    %v786 = vpack.c.b16 %v770, %v770
    %v787 = vpack.c.b16 %v771, %v771
    %v788 = vpack.c.b16 %v772, %v772
    %v789 = vpack.c.b16 %v773, %v773
    %v790 = vpack.c.b16 %v774, %v774
    %v791 = vpack.c.b16 %v775, %v775
    %v792 = vpack.c.b16 %v776, %v776
    %v793 = vpack.c.b16 %v777, %v777
    %v794 = vpack.c.b16 %v778, %v778
    %v795 = vpack.c.b16 %v779, %v779
    %v796 = vpack.c.b16 %v780, %v780
    %v797 = vpack.c.b16 %v781, %v781
    %v798 = vpack.c.b16 %v782, %v782
    %v799 = vpack.c.b16 %v783, %v783
    %v800 = vpack.c.b16 %v784, %v784
    %817 = vst [vmem:[%s6] sm:$0xf] %v785
    %818 = vst [vmem:[%s6 + $0x4] sm:$0xf] %v786
    %819 = vst [vmem:[%s6 + $0x8] sm:$0xf] %v787
    %820 = vst [vmem:[%s6 + $0xc] sm:$0xf] %v788
    %821 = vst [vmem:[%s6 + $0x10] sm:$0xf] %v789
    %822 = vst [vmem:[%s6 + $0x14] sm:$0xf] %v790
    %823 = vst [vmem:[%s6 + $0x18] sm:$0xf] %v791
    %824 = vst [vmem:[%s6 + $0x1c] sm:$0xf] %v792
    %825 = vst [vmem:[%s6 + $0x20] sm:$0xf] %v793
    %826 = vst [vmem:[%s6 + $0x24] sm:$0xf] %v794
    %827 = vst [vmem:[%s6 + $0x28] sm:$0xf] %v795
    %828 = vst [vmem:[%s6 + $0x2c] sm:$0xf] %v796
    %829 = vst [vmem:[%s6 + $0x30] sm:$0xf] %v797
    %830 = vst [vmem:[%s6 + $0x34] sm:$0xf] %v798
    %831 = vst [vmem:[%s6 + $0x38] sm:$0xf] %v799
    %832 = vst [vmem:[%s6 + $0x3c] sm:$0xf] %v800
  $region33: #{hetero_graphsage_forward.11} parent=0 // pred_fallthru
    _
  // Predicated region
  $region34: #{hetero_graphsage_forward.11} parent=0 // pred_check
    _
  $region35: #{hetero_graphsage_forward.11} parent=0 // pred_check_branch
    %834 = sbr.rel (0) target = $region37
  $region36: #{hetero_graphsage_forward.11} parent=0 // pred_region
    _
  $region37: #{hetero_graphsage_forward.11} parent=0 // pred_fallthru
    _
  // Predicated region
  $region38: #{hetero_graphsage_forward.11} parent=0 // pred_check
    _
  $region39: #{hetero_graphsage_forward.11} parent=0 // pred_check_branch
    %836 = sbr.rel (0) target = $region41
  $region40: #{hetero_graphsage_forward.11} parent=0 // pred_region
    _
  $region41: #{hetero_graphsage_forward.11} parent=0 // pred_fallthru
    _

// kernel: hetero_graphsage_forward.7
$region0: #{hetero_graphsage_forward.7}
  #allocation0 [shape = 'u32[]', space=smem, size = 0x4, offset = 0x4, fixed_abs, tag = 'smem constant byte address 0x4 - core index']
  #allocation1 [shape = 'u32[144,128]{1,0:T(1,128)}', space=vmem, size = 0x12000, scoped, tag = 'internal scratch']
  #allocation2 [shape = 'f32[128,128]{1,0:T(8,128)}', space=vmem, size = 0x10000, scoped, tag = 'scratch operand']
  %s0 = inlined_call_operand.vmem [shape: bf16[128,128], index: 0, kind: input, shape index: {}]
  %s1 = inlined_call_operand.vmem [shape: bf16[128,128], index: 1, kind: input, shape index: {}]
  %s2 = inlined_call_operand.vmem [shape: bf16[128,128], index: 2, kind: input, shape index: {}]
  %s3 = inlined_call_operand.vmem [shape: bf16[128,128], index: 3, kind: input, shape index: {}]
  %s4 = inlined_call_operand.vmem [shape: bf16[128,128], index: 4, kind: input, shape index: {}]
  %s5 = inlined_call_operand.vmem [shape: f32[1,128], index: 5, kind: input, shape index: {}]
  %s6 = inlined_call_operand.vmem [shape: bf16[128,128], index: 6, kind: output, shape index: {}]
  %s7 = sld [smem:[#allocation0]]
  $region42: #{hetero_graphsage_forward.7} parent=0
    _
  %s9 = ssub.s32 1, %s7
  %s10 = scalar_select 0, %s9, %s7
  // Predicated region
  $region2: #{hetero_graphsage_forward.7} parent=0 // pred_check
    _
  $region3: #{hetero_graphsage_forward.7} parent=0 // pred_check_branch
    %12 = sbr.rel (0) target = $region5
  $region4: #{hetero_graphsage_forward.7} parent=0 // pred_region
    _
  $region5: #{hetero_graphsage_forward.7} parent=0 // pred_fallthru
    _
  // Predicated region
  $region6: #{hetero_graphsage_forward.7} parent=0 // pred_check
    _
  $region7: #{hetero_graphsage_forward.7} parent=0 // pred_check_branch
    %14 = sbr.rel (0) target = $region9
  $region8: #{hetero_graphsage_forward.7} parent=0 // pred_region
    _
  $region9: #{hetero_graphsage_forward.7} parent=0 // pred_fallthru
    _
  // Predicated region
  $region10: #{hetero_graphsage_forward.7} parent=0 // pred_check
    _
  $region11: #{hetero_graphsage_forward.7} parent=0 // pred_check_branch
    %16 = sbr.rel (0) target = $region13
  $region12: #{hetero_graphsage_forward.7} parent=0 // pred_region
    _
  $region13: #{hetero_graphsage_forward.7} parent=0 // pred_fallthru
    _
  // Predicated region
  $region14: #{hetero_graphsage_forward.7} parent=0 // pred_check
    _
  $region15: #{hetero_graphsage_forward.7} parent=0 // pred_check_branch
    %18 = sbr.rel (0) target = $region17
  $region16: #{hetero_graphsage_forward.7} parent=0 // pred_region
    _
  $region17: #{hetero_graphsage_forward.7} parent=0 // pred_fallthru
    _
  // Predicated region
  $region18: #{hetero_graphsage_forward.7} parent=0 // pred_check
    _
  $region19: #{hetero_graphsage_forward.7} parent=0 // pred_check_branch
    %20 = sbr.rel (0) target = $region21
  $region20: #{hetero_graphsage_forward.7} parent=0 // pred_region
    _
  $region21: #{hetero_graphsage_forward.7} parent=0 // pred_fallthru
    _
  // Predicated region
  $region22: #{hetero_graphsage_forward.7} parent=0 // pred_check
    _
  $region23: #{hetero_graphsage_forward.7} parent=0 // pred_check_branch
    %22 = sbr.rel (0) target = $region25
  $region24: #{hetero_graphsage_forward.7} parent=0 // pred_region
    _
  $region25: #{hetero_graphsage_forward.7} parent=0 // pred_fallthru
    _
  %p24 = scmp.eq.s32.totalorder 0, 0
  // Predicated region
  $region26: #{hetero_graphsage_forward.7} parent=0 // pred_check
    %p25 = pneg %p24
  $region27: #{hetero_graphsage_forward.7} parent=0 // pred_check_branch
    %27 = sbr.rel (%p25) target = $region29
  $region28: #{hetero_graphsage_forward.7} parent=0 // pred_region
    %28 = vst [vmem:[#allocation2] sm:$0xff] 0.0
    %29 = vst [vmem:[#allocation2 + $0x8] sm:$0xff] 0.0
    %30 = vst [vmem:[#allocation2 + $0x10] sm:$0xff] 0.0
    %31 = vst [vmem:[#allocation2 + $0x18] sm:$0xff] 0.0
    %32 = vst [vmem:[#allocation2 + $0x20] sm:$0xff] 0.0
    %33 = vst [vmem:[#allocation2 + $0x28] sm:$0xff] 0.0
    %34 = vst [vmem:[#allocation2 + $0x30] sm:$0xff] 0.0
    %35 = vst [vmem:[#allocation2 + $0x38] sm:$0xff] 0.0
    %36 = vst [vmem:[#allocation2 + $0x40] sm:$0xff] 0.0
    %37 = vst [vmem:[#allocation2 + $0x48] sm:$0xff] 0.0
    %38 = vst [vmem:[#allocation2 + $0x50] sm:$0xff] 0.0
    %39 = vst [vmem:[#allocation2 + $0x58] sm:$0xff] 0.0
    %40 = vst [vmem:[#allocation2 + $0x60] sm:$0xff] 0.0
    %41 = vst [vmem:[#allocation2 + $0x68] sm:$0xff] 0.0
    %42 = vst [vmem:[#allocation2 + $0x70] sm:$0xff] 0.0
    %43 = vst [vmem:[#allocation2 + $0x78] sm:$0xff] 0.0
  $region29: #{hetero_graphsage_forward.7} parent=0 // pred_fallthru
    _
  %v44 = vld [vmem:[#allocation2] sm:$0xff]
  %v45 = vld [vmem:[#allocation2 + $0x8] sm:$0xff]
  %v46 = vld [vmem:[#allocation2 + $0x10] sm:$0xff]
  %v47 = vld [vmem:[#allocation2 + $0x18] sm:$0xff]
  %v48 = vld [vmem:[#allocation2 + $0x20] sm:$0xff]
  %v49 = vld [vmem:[#allocation2 + $0x28] sm:$0xff]
  %v50 = vld [vmem:[#allocation2 + $0x30] sm:$0xff]
  %v51 = vld [vmem:[#allocation2 + $0x38] sm:$0xff]
  %v52 = vld [vmem:[#allocation2 + $0x40] sm:$0xff]
  %v53 = vld [vmem:[#allocation2 + $0x48] sm:$0xff]
  %v54 = vld [vmem:[#allocation2 + $0x50] sm:$0xff]
  %v55 = vld [vmem:[#allocation2 + $0x58] sm:$0xff]
  %v56 = vld [vmem:[#allocation2 + $0x60] sm:$0xff]
  %v57 = vld [vmem:[#allocation2 + $0x68] sm:$0xff]
  %v58 = vld [vmem:[#allocation2 + $0x70] sm:$0xff]
  %v59 = vld [vmem:[#allocation2 + $0x78] sm:$0xff]
  %v60 = vld [vmem:[%s0] sm:$0xf]
  %v61 = vld [vmem:[%s0 + $0x4] sm:$0xf]
  %v62 = vld [vmem:[%s0 + $0x8] sm:$0xf]
  %v63 = vld [vmem:[%s0 + $0xc] sm:$0xf]
  %v64 = vld [vmem:[%s0 + $0x10] sm:$0xf]
  %v65 = vld [vmem:[%s0 + $0x14] sm:$0xf]
  %v66 = vld [vmem:[%s0 + $0x18] sm:$0xf]
  %v67 = vld [vmem:[%s0 + $0x1c] sm:$0xf]
  %v68 = vld [vmem:[%s0 + $0x20] sm:$0xf]
  %v69 = vld [vmem:[%s0 + $0x24] sm:$0xf]
  %v70 = vld [vmem:[%s0 + $0x28] sm:$0xf]
  %v71 = vld [vmem:[%s0 + $0x2c] sm:$0xf]
  %v72 = vld [vmem:[%s0 + $0x30] sm:$0xf]
  %v73 = vld [vmem:[%s0 + $0x34] sm:$0xf]
  %v74 = vld [vmem:[%s0 + $0x38] sm:$0xf]
  %v75 = vld [vmem:[%s0 + $0x3c] sm:$0xf]
  %v76 = vld [vmem:[%s1] sm:$0xf]
  %v77 = vld [vmem:[%s1 + $0x4] sm:$0xf]
  %v78 = vld [vmem:[%s1 + $0x8] sm:$0xf]
  %v79 = vld [vmem:[%s1 + $0xc] sm:$0xf]
  %v80 = vld [vmem:[%s1 + $0x10] sm:$0xf]
  %v81 = vld [vmem:[%s1 + $0x14] sm:$0xf]
  %v82 = vld [vmem:[%s1 + $0x18] sm:$0xf]
  %v83 = vld [vmem:[%s1 + $0x1c] sm:$0xf]
  %v84 = vld [vmem:[%s1 + $0x20] sm:$0xf]
  %v85 = vld [vmem:[%s1 + $0x24] sm:$0xf]
  %v86 = vld [vmem:[%s1 + $0x28] sm:$0xf]
  %v87 = vld [vmem:[%s1 + $0x2c] sm:$0xf]
  %v88 = vld [vmem:[%s1 + $0x30] sm:$0xf]
  %v89 = vld [vmem:[%s1 + $0x34] sm:$0xf]
  %v90 = vld [vmem:[%s1 + $0x38] sm:$0xf]
  %v91 = vld [vmem:[%s1 + $0x3c] sm:$0xf]
  %v108 = vunpack.c.l.b16 %v60
  %v109 = vunpack.c.l.b16 %v61
  %v110 = vunpack.c.l.b16 %v62
  %v111 = vunpack.c.l.b16 %v63
  %v112 = vunpack.c.l.b16 %v64
  %v113 = vunpack.c.l.b16 %v65
  %v114 = vunpack.c.l.b16 %v66
  %v115 = vunpack.c.l.b16 %v67
  %v116 = vunpack.c.l.b16 %v68
  %v117 = vunpack.c.l.b16 %v69
  %v118 = vunpack.c.l.b16 %v70
  %v119 = vunpack.c.l.b16 %v71
  %v120 = vunpack.c.l.b16 %v72
  %v121 = vunpack.c.l.b16 %v73
  %v122 = vunpack.c.l.b16 %v74
  %v123 = vunpack.c.l.b16 %v75
  %v124 = vpack.c.b16 %v109, %v108
  %v125 = vpack.c.b16 %v111, %v110
  %v126 = vpack.c.b16 %v113, %v112
  %v127 = vpack.c.b16 %v115, %v114
  %v128 = vpack.c.b16 %v117, %v116
  %v129 = vpack.c.b16 %v119, %v118
  %v130 = vpack.c.b16 %v121, %v120
  %v131 = vpack.c.b16 %v123, %v122
  %v156 = vunpack.c.l.b16 %v76
  %v157 = vunpack.c.l.b16 %v77
  %v158 = vunpack.c.l.b16 %v78
  %v159 = vunpack.c.l.b16 %v79
  %v160 = vunpack.c.l.b16 %v80
  %v161 = vunpack.c.l.b16 %v81
  %v162 = vunpack.c.l.b16 %v82
  %v163 = vunpack.c.l.b16 %v83
  %v164 = vunpack.c.l.b16 %v84
  %v165 = vunpack.c.l.b16 %v85
  %v166 = vunpack.c.l.b16 %v86
  %v167 = vunpack.c.l.b16 %v87
  %v168 = vunpack.c.l.b16 %v88
  %v169 = vunpack.c.l.b16 %v89
  %v170 = vunpack.c.l.b16 %v90
  %v171 = vunpack.c.l.b16 %v91
  %v172 = vpack.c.b16 %v157, %v156
  %v173 = vpack.c.b16 %v159, %v158
  %v174 = vpack.c.b16 %v161, %v160
  %v175 = vpack.c.b16 %v163, %v162
  %v176 = vpack.c.b16 %v165, %v164
  %v177 = vpack.c.b16 %v167, %v166
  %v178 = vpack.c.b16 %v169, %v168
  %v179 = vpack.c.b16 %v171, %v170
  %188 = vmatprep.subr.bf16.mxu0 0
  %189 = vmatpush1.bf16.msra.mxu0 %v172
  %190 = vmatprep.subr.bf16.mxu0 0
  %191 = vmatpush1.bf16.msra.mxu0 %v173
  %192 = vmatprep.subr.bf16.mxu0 0
  %193 = vmatpush1.bf16.msra.mxu0 %v174
  %194 = vmatprep.subr.bf16.mxu0 0
  %195 = vmatpush1.bf16.msra.mxu0 %v175
  %196 = vmatprep.subr.bf16.mxu0 0
  %197 = vmatpush1.bf16.msra.mxu0 %v176
  %198 = vmatprep.subr.bf16.mxu0 0
  %199 = vmatpush1.bf16.msra.mxu0 %v177
  %200 = vmatprep.subr.bf16.mxu0 0
  %201 = vmatpush1.bf16.msra.mxu0 %v178
  %202 = vmatprep.subr.bf16.mxu0 0
  %203 = vmatpush1.bf16.msra.mxu0 %v179
  %204 = vmatprep.subr.bf16.mxu0 0
  %205 = vmatpush1.bf16.msra.mxu0 0
  %206 = vmatprep.subr.bf16.mxu0 0
  %207 = vmatpush1.bf16.msra.mxu0 0
  %208 = vmatprep.subr.bf16.mxu0 0
  %209 = vmatpush1.bf16.msra.mxu0 0
  %210 = vmatprep.subr.bf16.mxu0 0
  %211 = vmatpush1.bf16.msra.mxu0 0
  %212 = vmatprep.subr.bf16.mxu0 0
  %213 = vmatpush1.bf16.msra.mxu0 0
  %214 = vmatprep.subr.bf16.mxu0 0
  %215 = vmatpush1.bf16.msra.mxu0 0
  %216 = vmatprep.subr.bf16.mxu0 0
  %217 = vmatpush1.bf16.msra.mxu0 0
  %218 = vmatprep.subr.bf16.mxu0 0
  %219 = vmatpush1.bf16.msra.mxu0 0
  %220 = vmatprep.mubr.bf16.mxu0 0
  %221 = vmatmul.mubr.bf16.gmra.mrb[0].mxu0 %v124
  %v222 = vpop.f32.mrb[0].mxu0
  %v223 = vadd.f32 0.0, %v222
  %v224 = vpop.f32.mrb[0].mxu0
  %v225 = vpop.f32.mrb[0].mxu0
  %v226 = vadd.f32 0.0, %v225
  %v227 = vpop.f32.mrb[0].mxu0
  %228 = vmatprep.mubr.bf16.mxu0 0
  %229 = vmatmul.mubr.bf16.gmra.mrb[0].mxu0 %v125
  %v230 = vpop.f32.mrb[0].mxu0
  %v231 = vadd.f32 0.0, %v230
  %v232 = vpop.f32.mrb[0].mxu0
  %v233 = vpop.f32.mrb[0].mxu0
  %v234 = vadd.f32 0.0, %v233
  %v235 = vpop.f32.mrb[0].mxu0
  %236 = vmatprep.mubr.bf16.mxu0 0
  %237 = vmatmul.mubr.bf16.gmra.mrb[0].mxu0 %v126
  %v238 = vpop.f32.mrb[0].mxu0
  %v239 = vadd.f32 0.0, %v238
  %v240 = vpop.f32.mrb[0].mxu0
  %v241 = vpop.f32.mrb[0].mxu0
  %v242 = vadd.f32 0.0, %v241
  %v243 = vpop.f32.mrb[0].mxu0
  %244 = vmatprep.mubr.bf16.mxu0 0
  %245 = vmatmul.mubr.bf16.gmra.mrb[0].mxu0 %v127
  %v246 = vpop.f32.mrb[0].mxu0
  %v247 = vadd.f32 0.0, %v246
  %v248 = vpop.f32.mrb[0].mxu0
  %v249 = vpop.f32.mrb[0].mxu0
  %v250 = vadd.f32 0.0, %v249
  %v251 = vpop.f32.mrb[0].mxu0
  %252 = vmatprep.mubr.bf16.mxu0 0
  %253 = vmatmul.mubr.bf16.gmra.mrb[0].mxu0 %v128
  %v254 = vpop.f32.mrb[0].mxu0
  %v255 = vadd.f32 0.0, %v254
  %v256 = vpop.f32.mrb[0].mxu0
  %v257 = vpop.f32.mrb[0].mxu0
  %v258 = vadd.f32 0.0, %v257
  %v259 = vpop.f32.mrb[0].mxu0
  %260 = vmatprep.mubr.bf16.mxu0 0
  %261 = vmatmul.mubr.bf16.gmra.mrb[0].mxu0 %v129
  %v262 = vpop.f32.mrb[0].mxu0
  %v263 = vadd.f32 0.0, %v262
  %v264 = vpop.f32.mrb[0].mxu0
  %v265 = vpop.f32.mrb[0].mxu0
  %v266 = vadd.f32 0.0, %v265
  %v267 = vpop.f32.mrb[0].mxu0
  %268 = vmatprep.mubr.bf16.mxu0 0
  %269 = vmatmul.mubr.bf16.gmra.mrb[0].mxu0 %v130
  %v270 = vpop.f32.mrb[0].mxu0
  %v271 = vadd.f32 0.0, %v270
  %v272 = vpop.f32.mrb[0].mxu0
  %v273 = vpop.f32.mrb[0].mxu0
  %v274 = vadd.f32 0.0, %v273
  %v275 = vpop.f32.mrb[0].mxu0
  %276 = vmatprep.mubr.bf16.mxu0 0
  %277 = vmatmul.mubr.bf16.gmra.mrb[0].mxu0 %v131
  %v278 = vpop.f32.mrb[0].mxu0
  %v279 = vadd.f32 0.0, %v278
  %v280 = vpop.f32.mrb[0].mxu0
  %v281 = vpop.f32.mrb[0].mxu0
  %v282 = vadd.f32 0.0, %v281
  %v283 = vpop.f32.mrb[0].mxu0
  %284 = vdwg.mxu0
  %v285 = vadd.f32 %v44, %v223
  %v286 = vadd.f32 %v45, %v226
  %v287 = vadd.f32 %v46, %v231
  %v288 = vadd.f32 %v47, %v234
  %v289 = vadd.f32 %v48, %v239
  %v290 = vadd.f32 %v49, %v242
  %v291 = vadd.f32 %v50, %v247
  %v292 = vadd.f32 %v51, %v250
  %v293 = vadd.f32 %v52, %v255
  %v294 = vadd.f32 %v53, %v258
  %v295 = vadd.f32 %v54, %v263
  %v296 = vadd.f32 %v55, %v266
  %v297 = vadd.f32 %v56, %v271
  %v298 = vadd.f32 %v57, %v274
  %v299 = vadd.f32 %v58, %v279
  %v300 = vadd.f32 %v59, %v282
  %301 = vst [vmem:[#allocation2] sm:$0xff] %v285
  %302 = vst [vmem:[#allocation2 + $0x8] sm:$0xff] %v286
  %303 = vst [vmem:[#allocation2 + $0x10] sm:$0xff] %v287
  %304 = vst [vmem:[#allocation2 + $0x18] sm:$0xff] %v288
  %305 = vst [vmem:[#allocation2 + $0x20] sm:$0xff] %v289
  %306 = vst [vmem:[#allocation2 + $0x28] sm:$0xff] %v290
  %307 = vst [vmem:[#allocation2 + $0x30] sm:$0xff] %v291
  %308 = vst [vmem:[#allocation2 + $0x38] sm:$0xff] %v292
  %309 = vst [vmem:[#allocation2 + $0x40] sm:$0xff] %v293
  %310 = vst [vmem:[#allocation2 + $0x48] sm:$0xff] %v294
  %311 = vst [vmem:[#allocation2 + $0x50] sm:$0xff] %v295
  %312 = vst [vmem:[#allocation2 + $0x58] sm:$0xff] %v296
  %313 = vst [vmem:[#allocation2 + $0x60] sm:$0xff] %v297
  %314 = vst [vmem:[#allocation2 + $0x68] sm:$0xff] %v298
  %315 = vst [vmem:[#allocation2 + $0x70] sm:$0xff] %v299
  %316 = vst [vmem:[#allocation2 + $0x78] sm:$0xff] %v300
  // Predicated region
  $region30: #{hetero_graphsage_forward.7} parent=0 // pred_check
    %p317 = pneg %p24
  $region31: #{hetero_graphsage_forward.7} parent=0 // pred_check_branch
    %319 = sbr.rel (%p317) target = $region33
  $region32: #{hetero_graphsage_forward.7} parent=0 // pred_region
    %v320 = vld [vmem:[#allocation2] sm:$0xff]
    %v321 = vld [vmem:[#allocation2 + $0x8] sm:$0xff]
    %v322 = vld [vmem:[#allocation2 + $0x10] sm:$0xff]
    %v323 = vld [vmem:[#allocation2 + $0x18] sm:$0xff]
    %v324 = vld [vmem:[#allocation2 + $0x20] sm:$0xff]
    %v325 = vld [vmem:[#allocation2 + $0x28] sm:$0xff]
    %v326 = vld [vmem:[#allocation2 + $0x30] sm:$0xff]
    %v327 = vld [vmem:[#allocation2 + $0x38] sm:$0xff]
    %v328 = vld [vmem:[#allocation2 + $0x40] sm:$0xff]
    %v329 = vld [vmem:[#allocation2 + $0x48] sm:$0xff]
    %v330 = vld [vmem:[#allocation2 + $0x50] sm:$0xff]
    %v331 = vld [vmem:[#allocation2 + $0x58] sm:$0xff]
    %v332 = vld [vmem:[#allocation2 + $0x60] sm:$0xff]
    %v333 = vld [vmem:[#allocation2 + $0x68] sm:$0xff]
    %v334 = vld [vmem:[#allocation2 + $0x70] sm:$0xff]
    %v335 = vld [vmem:[#allocation2 + $0x78] sm:$0xff]
    %v336 = vpack.c.bf16 %v321, %v320
    %v337 = vpack.c.bf16 %v323, %v322
    %v338 = vpack.c.bf16 %v325, %v324
    %v339 = vpack.c.bf16 %v327, %v326
    %v340 = vpack.c.bf16 %v329, %v328
    %v341 = vpack.c.bf16 %v331, %v330
    %v342 = vpack.c.bf16 %v333, %v332
    %v343 = vpack.c.bf16 %v335, %v334
    %v344 = vld [vmem:[%s3] sm:$0xf]
    %v345 = vld [vmem:[%s3 + $0x4] sm:$0xf]
    %v346 = vld [vmem:[%s3 + $0x8] sm:$0xf]
    %v347 = vld [vmem:[%s3 + $0xc] sm:$0xf]
    %v348 = vld [vmem:[%s3 + $0x10] sm:$0xf]
    %v349 = vld [vmem:[%s3 + $0x14] sm:$0xf]
    %v350 = vld [vmem:[%s3 + $0x18] sm:$0xf]
    %v351 = vld [vmem:[%s3 + $0x1c] sm:$0xf]
    %v352 = vld [vmem:[%s3 + $0x20] sm:$0xf]
    %v353 = vld [vmem:[%s3 + $0x24] sm:$0xf]
    %v354 = vld [vmem:[%s3 + $0x28] sm:$0xf]
    %v355 = vld [vmem:[%s3 + $0x2c] sm:$0xf]
    %v356 = vld [vmem:[%s3 + $0x30] sm:$0xf]
    %v357 = vld [vmem:[%s3 + $0x34] sm:$0xf]
    %v358 = vld [vmem:[%s3 + $0x38] sm:$0xf]
    %v359 = vld [vmem:[%s3 + $0x3c] sm:$0xf]
    %v360 = vld [vmem:[%s2] sm:$0xf]
    %v361 = vld [vmem:[%s2 + $0x4] sm:$0xf]
    %v362 = vld [vmem:[%s2 + $0x8] sm:$0xf]
    %v363 = vld [vmem:[%s2 + $0xc] sm:$0xf]
    %v364 = vld [vmem:[%s2 + $0x10] sm:$0xf]
    %v365 = vld [vmem:[%s2 + $0x14] sm:$0xf]
    %v366 = vld [vmem:[%s2 + $0x18] sm:$0xf]
    %v367 = vld [vmem:[%s2 + $0x1c] sm:$0xf]
    %v368 = vld [vmem:[%s2 + $0x20] sm:$0xf]
    %v369 = vld [vmem:[%s2 + $0x24] sm:$0xf]
    %v370 = vld [vmem:[%s2 + $0x28] sm:$0xf]
    %v371 = vld [vmem:[%s2 + $0x2c] sm:$0xf]
    %v372 = vld [vmem:[%s2 + $0x30] sm:$0xf]
    %v373 = vld [vmem:[%s2 + $0x34] sm:$0xf]
    %v374 = vld [vmem:[%s2 + $0x38] sm:$0xf]
    %v375 = vld [vmem:[%s2 + $0x3c] sm:$0xf]
    %v376 = vld [vmem:[%s4] sm:$0xf]
    %v377 = vld [vmem:[%s4 + $0x4] sm:$0xf]
    %v378 = vld [vmem:[%s4 + $0x8] sm:$0xf]
    %v379 = vld [vmem:[%s4 + $0xc] sm:$0xf]
    %v380 = vld [vmem:[%s4 + $0x10] sm:$0xf]
    %v381 = vld [vmem:[%s4 + $0x14] sm:$0xf]
    %v382 = vld [vmem:[%s4 + $0x18] sm:$0xf]
    %v383 = vld [vmem:[%s4 + $0x1c] sm:$0xf]
    %v384 = vld [vmem:[%s4 + $0x20] sm:$0xf]
    %v385 = vld [vmem:[%s4 + $0x24] sm:$0xf]
    %v386 = vld [vmem:[%s4 + $0x28] sm:$0xf]
    %v387 = vld [vmem:[%s4 + $0x2c] sm:$0xf]
    %v388 = vld [vmem:[%s4 + $0x30] sm:$0xf]
    %v389 = vld [vmem:[%s4 + $0x34] sm:$0xf]
    %v390 = vld [vmem:[%s4 + $0x38] sm:$0xf]
    %v391 = vld [vmem:[%s4 + $0x3c] sm:$0xf]
    %v408 = vunpack.c.l.b16 %v360
    %v409 = vunpack.c.l.b16 %v361
    %v410 = vunpack.c.l.b16 %v362
    %v411 = vunpack.c.l.b16 %v363
    %v412 = vunpack.c.l.b16 %v364
    %v413 = vunpack.c.l.b16 %v365
    %v414 = vunpack.c.l.b16 %v366
    %v415 = vunpack.c.l.b16 %v367
    %v416 = vunpack.c.l.b16 %v368
    %v417 = vunpack.c.l.b16 %v369
    %v418 = vunpack.c.l.b16 %v370
    %v419 = vunpack.c.l.b16 %v371
    %v420 = vunpack.c.l.b16 %v372
    %v421 = vunpack.c.l.b16 %v373
    %v422 = vunpack.c.l.b16 %v374
    %v423 = vunpack.c.l.b16 %v375
    %v424 = vpack.c.b16 %v409, %v408
    %v425 = vpack.c.b16 %v411, %v410
    %v426 = vpack.c.b16 %v413, %v412
    %v427 = vpack.c.b16 %v415, %v414
    %v428 = vpack.c.b16 %v417, %v416
    %v429 = vpack.c.b16 %v419, %v418
    %v430 = vpack.c.b16 %v421, %v420
    %v431 = vpack.c.b16 %v423, %v422
    %v456 = vunpack.c.l.b16 %v376
    %v457 = vunpack.c.l.b16 %v377
    %v458 = vunpack.c.l.b16 %v378
    %v459 = vunpack.c.l.b16 %v379
    %v460 = vunpack.c.l.b16 %v380
    %v461 = vunpack.c.l.b16 %v381
    %v462 = vunpack.c.l.b16 %v382
    %v463 = vunpack.c.l.b16 %v383
    %v464 = vunpack.c.l.b16 %v384
    %v465 = vunpack.c.l.b16 %v385
    %v466 = vunpack.c.l.b16 %v386
    %v467 = vunpack.c.l.b16 %v387
    %v468 = vunpack.c.l.b16 %v388
    %v469 = vunpack.c.l.b16 %v389
    %v470 = vunpack.c.l.b16 %v390
    %v471 = vunpack.c.l.b16 %v391
    %v472 = vpack.c.b16 %v457, %v456
    %v473 = vpack.c.b16 %v459, %v458
    %v474 = vpack.c.b16 %v461, %v460
    %v475 = vpack.c.b16 %v463, %v462
    %v476 = vpack.c.b16 %v465, %v464
    %v477 = vpack.c.b16 %v467, %v466
    %v478 = vpack.c.b16 %v469, %v468
    %v479 = vpack.c.b16 %v471, %v470
    %488 = vmatprep.subr.bf16.mxu0 0
    %489 = vmatpush1.bf16.msra.mxu0 %v472
    %490 = vmatprep.subr.bf16.mxu0 0
    %491 = vmatpush1.bf16.msra.mxu0 %v473
    %492 = vmatprep.subr.bf16.mxu0 0
    %493 = vmatpush1.bf16.msra.mxu0 %v474
    %494 = vmatprep.subr.bf16.mxu0 0
    %495 = vmatpush1.bf16.msra.mxu0 %v475
    %496 = vmatprep.subr.bf16.mxu0 0
    %497 = vmatpush1.bf16.msra.mxu0 %v476
    %498 = vmatprep.subr.bf16.mxu0 0
    %499 = vmatpush1.bf16.msra.mxu0 %v477
    %500 = vmatprep.subr.bf16.mxu0 0
    %501 = vmatpush1.bf16.msra.mxu0 %v478
    %502 = vmatprep.subr.bf16.mxu0 0
    %503 = vmatpush1.bf16.msra.mxu0 %v479
    %504 = vmatprep.subr.bf16.mxu0 0
    %505 = vmatpush1.bf16.msra.mxu0 0
    %506 = vmatprep.subr.bf16.mxu0 0
    %507 = vmatpush1.bf16.msra.mxu0 0
    %508 = vmatprep.subr.bf16.mxu0 0
    %509 = vmatpush1.bf16.msra.mxu0 0
    %510 = vmatprep.subr.bf16.mxu0 0
    %511 = vmatpush1.bf16.msra.mxu0 0
    %512 = vmatprep.subr.bf16.mxu0 0
    %513 = vmatpush1.bf16.msra.mxu0 0
    %514 = vmatprep.subr.bf16.mxu0 0
    %515 = vmatpush1.bf16.msra.mxu0 0
    %516 = vmatprep.subr.bf16.mxu0 0
    %517 = vmatpush1.bf16.msra.mxu0 0
    %518 = vmatprep.subr.bf16.mxu0 0
    %519 = vmatpush1.bf16.msra.mxu0 0
    %520 = vmatprep.mubr.bf16.mxu0 0
    %521 = vmatmul.mubr.bf16.gmra.mrb[0].mxu0 %v424
    %v522 = vpop.f32.mrb[0].mxu0
    %v523 = vadd.f32 0.0, %v522
    %v524 = vpop.f32.mrb[0].mxu0
    %v525 = vpop.f32.mrb[0].mxu0
    %v526 = vadd.f32 0.0, %v525
    %v527 = vpop.f32.mrb[0].mxu0
    %528 = vmatprep.mubr.bf16.mxu0 0
    %529 = vmatmul.mubr.bf16.gmra.mrb[0].mxu0 %v425
    %v530 = vpop.f32.mrb[0].mxu0
    %v531 = vadd.f32 0.0, %v530
    %v532 = vpop.f32.mrb[0].mxu0
    %v533 = vpop.f32.mrb[0].mxu0
    %v534 = vadd.f32 0.0, %v533
    %v535 = vpop.f32.mrb[0].mxu0
    %536 = vmatprep.mubr.bf16.mxu0 0
    %537 = vmatmul.mubr.bf16.gmra.mrb[0].mxu0 %v426
    %v538 = vpop.f32.mrb[0].mxu0
    %v539 = vadd.f32 0.0, %v538
    %v540 = vpop.f32.mrb[0].mxu0
    %v541 = vpop.f32.mrb[0].mxu0
    %v542 = vadd.f32 0.0, %v541
    %v543 = vpop.f32.mrb[0].mxu0
    %544 = vmatprep.mubr.bf16.mxu0 0
    %545 = vmatmul.mubr.bf16.gmra.mrb[0].mxu0 %v427
    %v546 = vpop.f32.mrb[0].mxu0
    %v547 = vadd.f32 0.0, %v546
    %v548 = vpop.f32.mrb[0].mxu0
    %v549 = vpop.f32.mrb[0].mxu0
    %v550 = vadd.f32 0.0, %v549
    %v551 = vpop.f32.mrb[0].mxu0
    %552 = vmatprep.mubr.bf16.mxu0 0
    %553 = vmatmul.mubr.bf16.gmra.mrb[0].mxu0 %v428
    %v554 = vpop.f32.mrb[0].mxu0
    %v555 = vadd.f32 0.0, %v554
    %v556 = vpop.f32.mrb[0].mxu0
    %v557 = vpop.f32.mrb[0].mxu0
    %v558 = vadd.f32 0.0, %v557
    %v559 = vpop.f32.mrb[0].mxu0
    %560 = vmatprep.mubr.bf16.mxu0 0
    %561 = vmatmul.mubr.bf16.gmra.mrb[0].mxu0 %v429
    %v562 = vpop.f32.mrb[0].mxu0
    %v563 = vadd.f32 0.0, %v562
    %v564 = vpop.f32.mrb[0].mxu0
    %v565 = vpop.f32.mrb[0].mxu0
    %v566 = vadd.f32 0.0, %v565
    %v567 = vpop.f32.mrb[0].mxu0
    %568 = vmatprep.mubr.bf16.mxu0 0
    %569 = vmatmul.mubr.bf16.gmra.mrb[0].mxu0 %v430
    %v570 = vpop.f32.mrb[0].mxu0
    %v571 = vadd.f32 0.0, %v570
    %v572 = vpop.f32.mrb[0].mxu0
    %v573 = vpop.f32.mrb[0].mxu0
    %v574 = vadd.f32 0.0, %v573
    %v575 = vpop.f32.mrb[0].mxu0
    %576 = vmatprep.mubr.bf16.mxu0 0
    %577 = vmatmul.mubr.bf16.gmra.mrb[0].mxu0 %v431
    %v578 = vpop.f32.mrb[0].mxu0
    %v579 = vadd.f32 0.0, %v578
    %v580 = vpop.f32.mrb[0].mxu0
    %v581 = vpop.f32.mrb[0].mxu0
    %v582 = vadd.f32 0.0, %v581
    %v583 = vpop.f32.mrb[0].mxu0
    %584 = vdwg.mxu0
    %v601 = vunpack.c.l.b16 %v344
    %v602 = vunpack.c.l.b16 %v345
    %v603 = vunpack.c.l.b16 %v346
    %v604 = vunpack.c.l.b16 %v347
    %v605 = vunpack.c.l.b16 %v348
    %v606 = vunpack.c.l.b16 %v349
    %v607 = vunpack.c.l.b16 %v350
    %v608 = vunpack.c.l.b16 %v351
    %v609 = vunpack.c.l.b16 %v352
    %v610 = vunpack.c.l.b16 %v353
    %v611 = vunpack.c.l.b16 %v354
    %v612 = vunpack.c.l.b16 %v355
    %v613 = vunpack.c.l.b16 %v356
    %v614 = vunpack.c.l.b16 %v357
    %v615 = vunpack.c.l.b16 %v358
    %v616 = vunpack.c.l.b16 %v359
    %v617 = vpack.c.b16 %v602, %v601
    %v618 = vpack.c.b16 %v604, %v603
    %v619 = vpack.c.b16 %v606, %v605
    %v620 = vpack.c.b16 %v608, %v607
    %v621 = vpack.c.b16 %v610, %v609
    %v622 = vpack.c.b16 %v612, %v611
    %v623 = vpack.c.b16 %v614, %v613
    %v624 = vpack.c.b16 %v616, %v615
    %633 = vmatprep.subr.bf16.mxu0 0
    %634 = vmatpush1.bf16.msra.mxu0 %v617
    %635 = vmatprep.subr.bf16.mxu0 0
    %636 = vmatpush1.bf16.msra.mxu0 %v618
    %637 = vmatprep.subr.bf16.mxu0 0
    %638 = vmatpush1.bf16.msra.mxu0 %v619
    %639 = vmatprep.subr.bf16.mxu0 0
    %640 = vmatpush1.bf16.msra.mxu0 %v620
    %641 = vmatprep.subr.bf16.mxu0 0
    %642 = vmatpush1.bf16.msra.mxu0 %v621
    %643 = vmatprep.subr.bf16.mxu0 0
    %644 = vmatpush1.bf16.msra.mxu0 %v622
    %645 = vmatprep.subr.bf16.mxu0 0
    %646 = vmatpush1.bf16.msra.mxu0 %v623
    %647 = vmatprep.subr.bf16.mxu0 0
    %648 = vmatpush1.bf16.msra.mxu0 %v624
    %649 = vmatprep.subr.bf16.mxu0 0
    %650 = vmatpush1.bf16.msra.mxu0 0
    %651 = vmatprep.subr.bf16.mxu0 0
    %652 = vmatpush1.bf16.msra.mxu0 0
    %653 = vmatprep.subr.bf16.mxu0 0
    %654 = vmatpush1.bf16.msra.mxu0 0
    %655 = vmatprep.subr.bf16.mxu0 0
    %656 = vmatpush1.bf16.msra.mxu0 0
    %657 = vmatprep.subr.bf16.mxu0 0
    %658 = vmatpush1.bf16.msra.mxu0 0
    %659 = vmatprep.subr.bf16.mxu0 0
    %660 = vmatpush1.bf16.msra.mxu0 0
    %661 = vmatprep.subr.bf16.mxu0 0
    %662 = vmatpush1.bf16.msra.mxu0 0
    %663 = vmatprep.subr.bf16.mxu0 0
    %664 = vmatpush1.bf16.msra.mxu0 0
    %665 = vmatprep.mubr.bf16.mxu0 0
    %666 = vmatmul.mubr.bf16.gmra.mrb[0].mxu0 %v336
    %v667 = vpop.f32.mrb[0].mxu0
    %v668 = vadd.f32 %v523, %v667
    %v669 = vpop.f32.mrb[0].mxu0
    %v670 = vpop.f32.mrb[0].mxu0
    %v671 = vadd.f32 %v526, %v670
    %v672 = vpop.f32.mrb[0].mxu0
    %673 = vmatprep.mubr.bf16.mxu0 0
    %674 = vmatmul.mubr.bf16.gmra.mrb[0].mxu0 %v337
    %v675 = vpop.f32.mrb[0].mxu0
    %v676 = vadd.f32 %v531, %v675
    %v677 = vpop.f32.mrb[0].mxu0
    %v678 = vpop.f32.mrb[0].mxu0
    %v679 = vadd.f32 %v534, %v678
    %v680 = vpop.f32.mrb[0].mxu0
    %681 = vmatprep.mubr.bf16.mxu0 0
    %682 = vmatmul.mubr.bf16.gmra.mrb[0].mxu0 %v338
    %v683 = vpop.f32.mrb[0].mxu0
    %v684 = vadd.f32 %v539, %v683
    %v685 = vpop.f32.mrb[0].mxu0
    %v686 = vpop.f32.mrb[0].mxu0
    %v687 = vadd.f32 %v542, %v686
    %v688 = vpop.f32.mrb[0].mxu0
    %689 = vmatprep.mubr.bf16.mxu0 0
    %690 = vmatmul.mubr.bf16.gmra.mrb[0].mxu0 %v339
    %v691 = vpop.f32.mrb[0].mxu0
    %v692 = vadd.f32 %v547, %v691
    %v693 = vpop.f32.mrb[0].mxu0
    %v694 = vpop.f32.mrb[0].mxu0
    %v695 = vadd.f32 %v550, %v694
    %v696 = vpop.f32.mrb[0].mxu0
    %697 = vmatprep.mubr.bf16.mxu0 0
    %698 = vmatmul.mubr.bf16.gmra.mrb[0].mxu0 %v340
    %v699 = vpop.f32.mrb[0].mxu0
    %v700 = vadd.f32 %v555, %v699
    %v701 = vpop.f32.mrb[0].mxu0
    %v702 = vpop.f32.mrb[0].mxu0
    %v703 = vadd.f32 %v558, %v702
    %v704 = vpop.f32.mrb[0].mxu0
    %705 = vmatprep.mubr.bf16.mxu0 0
    %706 = vmatmul.mubr.bf16.gmra.mrb[0].mxu0 %v341
    %v707 = vpop.f32.mrb[0].mxu0
    %v708 = vadd.f32 %v563, %v707
    %v709 = vpop.f32.mrb[0].mxu0
    %v710 = vpop.f32.mrb[0].mxu0
    %v711 = vadd.f32 %v566, %v710
    %v712 = vpop.f32.mrb[0].mxu0
    %713 = vmatprep.mubr.bf16.mxu0 0
    %714 = vmatmul.mubr.bf16.gmra.mrb[0].mxu0 %v342
    %v715 = vpop.f32.mrb[0].mxu0
    %v716 = vadd.f32 %v571, %v715
    %v717 = vpop.f32.mrb[0].mxu0
    %v718 = vpop.f32.mrb[0].mxu0
    %v719 = vadd.f32 %v574, %v718
    %v720 = vpop.f32.mrb[0].mxu0
    %721 = vmatprep.mubr.bf16.mxu0 0
    %722 = vmatmul.mubr.bf16.gmra.mrb[0].mxu0 %v343
    %v723 = vpop.f32.mrb[0].mxu0
    %v724 = vadd.f32 %v579, %v723
    %v725 = vpop.f32.mrb[0].mxu0
    %v726 = vpop.f32.mrb[0].mxu0
    %v727 = vadd.f32 %v582, %v726
    %v728 = vpop.f32.mrb[0].mxu0
    %729 = vdwg.mxu0
    %v730 = vld [vmem:[%s5] sm:$0x1]
    %v732 = vlaneseq
    %v733 = vshrl.u32 %v732, 7
    %v734 = vsub.s32 0, %v733
    %v735 = vrot.slane %v730, %v734
    %v737 = vadd.f32 %v668, %v735
    %v738 = vadd.f32 %v671, %v735
    %v739 = vadd.f32 %v676, %v735
    %v740 = vadd.f32 %v679, %v735
    %v741 = vadd.f32 %v684, %v735
    %v742 = vadd.f32 %v687, %v735
    %v743 = vadd.f32 %v692, %v735
    %v744 = vadd.f32 %v695, %v735
    %v745 = vadd.f32 %v700, %v735
    %v746 = vadd.f32 %v703, %v735
    %v747 = vadd.f32 %v708, %v735
    %v748 = vadd.f32 %v711, %v735
    %v749 = vadd.f32 %v716, %v735
    %v750 = vadd.f32 %v719, %v735
    %v751 = vadd.f32 %v724, %v735
    %v752 = vadd.f32 %v727, %v735
    %v753 = vmax.f32 %v737, 0.0
    %v754 = vmax.f32 %v738, 0.0
    %v755 = vmax.f32 %v739, 0.0
    %v756 = vmax.f32 %v740, 0.0
    %v757 = vmax.f32 %v741, 0.0
    %v758 = vmax.f32 %v742, 0.0
    %v759 = vmax.f32 %v743, 0.0
    %v760 = vmax.f32 %v744, 0.0
    %v761 = vmax.f32 %v745, 0.0
    %v762 = vmax.f32 %v746, 0.0
    %v763 = vmax.f32 %v747, 0.0
    %v764 = vmax.f32 %v748, 0.0
    %v765 = vmax.f32 %v749, 0.0
    %v766 = vmax.f32 %v750, 0.0
    %v767 = vmax.f32 %v751, 0.0
    %v768 = vmax.f32 %v752, 0.0
    %v769 = vpack.c.bf16 %v754, %v753
    %v770 = vpack.c.bf16 %v756, %v755
    %v771 = vpack.c.bf16 %v758, %v757
    %v772 = vpack.c.bf16 %v760, %v759
    %v773 = vpack.c.bf16 %v762, %v761
    %v774 = vpack.c.bf16 %v764, %v763
    %v775 = vpack.c.bf16 %v766, %v765
    %v776 = vpack.c.bf16 %v768, %v767
    %v785 = vunpack.c.l.b16 %v769
    %v786 = vunpack.c.h.b16 %v769
    %v787 = vunpack.c.l.b16 %v770
    %v788 = vunpack.c.h.b16 %v770
    %v789 = vunpack.c.l.b16 %v771
    %v790 = vunpack.c.h.b16 %v771
    %v791 = vunpack.c.l.b16 %v772
    %v792 = vunpack.c.h.b16 %v772
    %v793 = vunpack.c.l.b16 %v773
    %v794 = vunpack.c.h.b16 %v773
    %v795 = vunpack.c.l.b16 %v774
    %v796 = vunpack.c.h.b16 %v774
    %v797 = vunpack.c.l.b16 %v775
    %v798 = vunpack.c.h.b16 %v775
    %v799 = vunpack.c.l.b16 %v776
    %v800 = vunpack.c.h.b16 %v776
    %v801 = vpack.c.b16 %v785, %v785
    %v802 = vpack.c.b16 %v786, %v786
    %v803 = vpack.c.b16 %v787, %v787
    %v804 = vpack.c.b16 %v788, %v788
    %v805 = vpack.c.b16 %v789, %v789
    %v806 = vpack.c.b16 %v790, %v790
    %v807 = vpack.c.b16 %v791, %v791
    %v808 = vpack.c.b16 %v792, %v792
    %v809 = vpack.c.b16 %v793, %v793
    %v810 = vpack.c.b16 %v794, %v794
    %v811 = vpack.c.b16 %v795, %v795
    %v812 = vpack.c.b16 %v796, %v796
    %v813 = vpack.c.b16 %v797, %v797
    %v814 = vpack.c.b16 %v798, %v798
    %v815 = vpack.c.b16 %v799, %v799
    %v816 = vpack.c.b16 %v800, %v800
    %833 = vst [vmem:[%s6] sm:$0xf] %v801
    %834 = vst [vmem:[%s6 + $0x4] sm:$0xf] %v802
    %835 = vst [vmem:[%s6 + $0x8] sm:$0xf] %v803
    %836 = vst [vmem:[%s6 + $0xc] sm:$0xf] %v804
    %837 = vst [vmem:[%s6 + $0x10] sm:$0xf] %v805
    %838 = vst [vmem:[%s6 + $0x14] sm:$0xf] %v806
    %839 = vst [vmem:[%s6 + $0x18] sm:$0xf] %v807
    %840 = vst [vmem:[%s6 + $0x1c] sm:$0xf] %v808
    %841 = vst [vmem:[%s6 + $0x20] sm:$0xf] %v809
    %842 = vst [vmem:[%s6 + $0x24] sm:$0xf] %v810
    %843 = vst [vmem:[%s6 + $0x28] sm:$0xf] %v811
    %844 = vst [vmem:[%s6 + $0x2c] sm:$0xf] %v812
    %845 = vst [vmem:[%s6 + $0x30] sm:$0xf] %v813
    %846 = vst [vmem:[%s6 + $0x34] sm:$0xf] %v814
    %847 = vst [vmem:[%s6 + $0x38] sm:$0xf] %v815
    %848 = vst [vmem:[%s6 + $0x3c] sm:$0xf] %v816
  $region33: #{hetero_graphsage_forward.7} parent=0 // pred_fallthru
    _
  // Predicated region
  $region34: #{hetero_graphsage_forward.7} parent=0 // pred_check
    _
  $region35: #{hetero_graphsage_forward.7} parent=0 // pred_check_branch
    %850 = sbr.rel (0) target = $region37
  $region36: #{hetero_graphsage_forward.7} parent=0 // pred_region
    _
  $region37: #{hetero_graphsage_forward.7} parent=0 // pred_fallthru
    _
  // Predicated region
  $region38: #{hetero_graphsage_forward.7} parent=0 // pred_check
    _
  $region39: #{hetero_graphsage_forward.7} parent=0 // pred_check_branch
    %852 = sbr.rel (0) target = $region41
  $region40: #{hetero_graphsage_forward.7} parent=0 // pred_region
    _
  $region41: #{hetero_graphsage_forward.7} parent=0 // pred_fallthru
    _

// kernel: hetero_graphsage_forward.13
$region0: #{hetero_graphsage_forward.13}
  #allocation0 [shape = 'u32[]', space=smem, size = 0x4, offset = 0x4, fixed_abs, tag = 'smem constant byte address 0x4 - core index']
  #allocation1 [shape = 'u32[144,128]{1,0:T(1,128)}', space=vmem, size = 0x12000, scoped, tag = 'internal scratch']
  %s0 = inlined_call_operand.vmem [shape: bf16[128,128], index: 0, kind: input, shape index: {}]
  %s1 = inlined_call_operand.vmem [shape: bf16[128,128], index: 1, kind: input, shape index: {}]
  %s2 = inlined_call_operand.vmem [shape: f32[1,128], index: 2, kind: output, shape index: {}]
  %s3 = sld [smem:[#allocation0]]
  $region18: #{hetero_graphsage_forward.13} parent=0
    _
  %s5 = ssub.s32 1, %s3
  %s6 = scalar_select 0, %s5, %s3
  // Predicated region
  $region2: #{hetero_graphsage_forward.13} parent=0 // pred_check
    _
  $region3: #{hetero_graphsage_forward.13} parent=0 // pred_check_branch
    %8 = sbr.rel (0) target = $region5
  $region4: #{hetero_graphsage_forward.13} parent=0 // pred_region
    _
  $region5: #{hetero_graphsage_forward.13} parent=0 // pred_fallthru
    _
  // Predicated region
  $region6: #{hetero_graphsage_forward.13} parent=0 // pred_check
    _
  $region7: #{hetero_graphsage_forward.13} parent=0 // pred_check_branch
    %10 = sbr.rel (0) target = $region9
  $region8: #{hetero_graphsage_forward.13} parent=0 // pred_region
    _
  $region9: #{hetero_graphsage_forward.13} parent=0 // pred_fallthru
    _
  %v11 = vld [vmem:[%s0] sm:$0xf]
  %v12 = vld [vmem:[%s0 + $0x4] sm:$0xf]
  %v13 = vld [vmem:[%s0 + $0x8] sm:$0xf]
  %v14 = vld [vmem:[%s0 + $0xc] sm:$0xf]
  %v15 = vld [vmem:[%s0 + $0x10] sm:$0xf]
  %v16 = vld [vmem:[%s0 + $0x14] sm:$0xf]
  %v17 = vld [vmem:[%s0 + $0x18] sm:$0xf]
  %v18 = vld [vmem:[%s0 + $0x1c] sm:$0xf]
  %v19 = vld [vmem:[%s0 + $0x20] sm:$0xf]
  %v20 = vld [vmem:[%s0 + $0x24] sm:$0xf]
  %v21 = vld [vmem:[%s0 + $0x28] sm:$0xf]
  %v22 = vld [vmem:[%s0 + $0x2c] sm:$0xf]
  %v23 = vld [vmem:[%s0 + $0x30] sm:$0xf]
  %v24 = vld [vmem:[%s0 + $0x34] sm:$0xf]
  %v25 = vld [vmem:[%s0 + $0x38] sm:$0xf]
  %v26 = vld [vmem:[%s0 + $0x3c] sm:$0xf]
  %v27 = vunpack.c.l.bf16 %v11
  %v28 = vunpack.c.l.bf16 %v12
  %v29 = vunpack.c.l.bf16 %v13
  %v30 = vunpack.c.l.bf16 %v14
  %v31 = vunpack.c.l.bf16 %v15
  %v32 = vunpack.c.l.bf16 %v16
  %v33 = vunpack.c.l.bf16 %v17
  %v34 = vunpack.c.l.bf16 %v18
  %v35 = vunpack.c.l.bf16 %v19
  %v36 = vunpack.c.l.bf16 %v20
  %v37 = vunpack.c.l.bf16 %v21
  %v38 = vunpack.c.l.bf16 %v22
  %v39 = vunpack.c.l.bf16 %v23
  %v40 = vunpack.c.l.bf16 %v24
  %v41 = vunpack.c.l.bf16 %v25
  %v42 = vunpack.c.l.bf16 %v26
  %v43 = vld [vmem:[%s1] sm:$0xf]
  %v44 = vld [vmem:[%s1 + $0x4] sm:$0xf]
  %v45 = vld [vmem:[%s1 + $0x8] sm:$0xf]
  %v46 = vld [vmem:[%s1 + $0xc] sm:$0xf]
  %v47 = vld [vmem:[%s1 + $0x10] sm:$0xf]
  %v48 = vld [vmem:[%s1 + $0x14] sm:$0xf]
  %v49 = vld [vmem:[%s1 + $0x18] sm:$0xf]
  %v50 = vld [vmem:[%s1 + $0x1c] sm:$0xf]
  %v51 = vld [vmem:[%s1 + $0x20] sm:$0xf]
  %v52 = vld [vmem:[%s1 + $0x24] sm:$0xf]
  %v53 = vld [vmem:[%s1 + $0x28] sm:$0xf]
  %v54 = vld [vmem:[%s1 + $0x2c] sm:$0xf]
  %v55 = vld [vmem:[%s1 + $0x30] sm:$0xf]
  %v56 = vld [vmem:[%s1 + $0x34] sm:$0xf]
  %v57 = vld [vmem:[%s1 + $0x38] sm:$0xf]
  %v58 = vld [vmem:[%s1 + $0x3c] sm:$0xf]
  %v59 = vunpack.c.l.bf16 %v43
  %v60 = vunpack.c.l.bf16 %v44
  %v61 = vunpack.c.l.bf16 %v45
  %v62 = vunpack.c.l.bf16 %v46
  %v63 = vunpack.c.l.bf16 %v47
  %v64 = vunpack.c.l.bf16 %v48
  %v65 = vunpack.c.l.bf16 %v49
  %v66 = vunpack.c.l.bf16 %v50
  %v67 = vunpack.c.l.bf16 %v51
  %v68 = vunpack.c.l.bf16 %v52
  %v69 = vunpack.c.l.bf16 %v53
  %v70 = vunpack.c.l.bf16 %v54
  %v71 = vunpack.c.l.bf16 %v55
  %v72 = vunpack.c.l.bf16 %v56
  %v73 = vunpack.c.l.bf16 %v57
  %v74 = vunpack.c.l.bf16 %v58
  %v75 = vmul.f32 %v27, %v59
  %v76 = vmul.f32 %v28, %v60
  %v77 = vmul.f32 %v29, %v61
  %v78 = vmul.f32 %v30, %v62
  %v79 = vmul.f32 %v31, %v63
  %v80 = vmul.f32 %v32, %v64
  %v81 = vmul.f32 %v33, %v65
  %v82 = vmul.f32 %v34, %v66
  %v83 = vmul.f32 %v35, %v67
  %v84 = vmul.f32 %v36, %v68
  %v85 = vmul.f32 %v37, %v69
  %v86 = vmul.f32 %v38, %v70
  %v87 = vmul.f32 %v39, %v71
  %v88 = vmul.f32 %v40, %v72
  %v89 = vmul.f32 %v41, %v73
  %v90 = vmul.f32 %v42, %v74
  %v91 = vadd.f32 %v75, %v76
  %v92 = vadd.f32 %v91, %v77
  %v93 = vadd.f32 %v92, %v78
  %v94 = vadd.f32 %v93, %v79
  %v95 = vadd.f32 %v94, %v80
  %v96 = vadd.f32 %v95, %v81
  %v97 = vadd.f32 %v96, %v82
  %v98 = vadd.f32 %v97, %v83
  %v99 = vadd.f32 %v98, %v84
  %v100 = vadd.f32 %v99, %v85
  %v101 = vadd.f32 %v100, %v86
  %v102 = vadd.f32 %v101, %v87
  %v103 = vadd.f32 %v102, %v88
  %v104 = vadd.f32 %v103, %v89
  %v105 = vadd.f32 %v104, %v90
  %v106 = vrot.slane %v105, 4
  %v107 = vadd.f32 %v105, %v106
  %v108 = vrot.slane %v107, 2
  %v109 = vadd.f32 %v107, %v108
  %v110 = vrot.slane %v109, 1
  %v111 = vadd.f32 %v109, %v110
  %112 = vst [vmem:[%s2] sm:$0x1] %v111
  // Predicated region
  $region10: #{hetero_graphsage_forward.13} parent=0 // pred_check
    _
  $region11: #{hetero_graphsage_forward.13} parent=0 // pred_check_branch
    %114 = sbr.rel (0) target = $region13
  $region12: #{hetero_graphsage_forward.13} parent=0 // pred_region
    _
  $region13: #{hetero_graphsage_forward.13} parent=0 // pred_fallthru
    _
  // Predicated region
  $region14: #{hetero_graphsage_forward.13} parent=0 // pred_check
    _
  $region15: #{hetero_graphsage_forward.13} parent=0 // pred_check_branch
    %116 = sbr.rel (0) target = $region17
  $region16: #{hetero_graphsage_forward.13} parent=0 // pred_region
    _
  $region17: #{hetero_graphsage_forward.13} parent=0 // pred_fallthru
    _

</llo_original>
